<compile_context>
chip_gen: v7x
topology: tpu7x:2x2x1
jax: 0.10.0
libtpu: 0.0.40
codegen_flags: <defaults>
</compile_context>

<pallas_src>
import functools
import math

import jax
import jax.numpy as jnp
from jax.experimental import pallas as pl
from jax.experimental.pallas import tpu as pltpu


_OUT_PAD = 128  # lane-dense padded width of the final Linear output


# ---------------------------------------------------------------------------
# Fused kernel. refs = (x, w0, w1, ..., w_{L-1}, w_out_pad, vecs, o)
#   x        : (B, in_dim)              f32
#   w*       : (in, out)                bf16 (stored transposed vs PyTorch)
#   vecs     : (1 + 3*(L-1) + 1, W) f32 packed rows:
#              row 0        = b0
#              rows 1+3k .. = b_k, gamma_k, beta_k      (k = 1..L-1)
#              last row     = b_out (padded to _OUT_PAD)
#   o        : (B, _OUT_PAD)            f32
# ---------------------------------------------------------------------------
def _fused_mlpb_kernel(*refs, n_layers: int, n_units: int):
    x_ref = refs[0]
    w_refs = refs[1:n_layers + 2]          # w0, w1..w_{L-1}, w_out_pad
    vec_ref = refs[n_layers + 2]
    o_ref = refs[-1]

    def vrow(r, width):
        return vec_ref[r:r + 1, :width]    # (1, width) f32, static slice

    def linear(h_f32, w_ref, bias):
        # bf16 x bf16 on the MXU, f32 accumulation.
        return jnp.dot(h_f32.astype(jnp.bfloat16), w_ref[...],
                       preferred_element_type=jnp.float32) + bias

    # Layer 0: Linear -> ReLU
    h = jnp.maximum(linear(x_ref[...], w_refs[0], vrow(0, n_units)), 0.0)

    # Hidden layers: Linear -> BatchNorm1d (training-mode batch stats) -> ReLU
    r = 1
    for i in range(1, n_layers):
        y = linear(h, w_refs[i], vrow(r, n_units))
        m = jnp.mean(y, axis=0, keepdims=True)                     # (1, U)
        d = y - m
        v = jnp.mean(d * d, axis=0, keepdims=True)                 # biased var
        y_hat = d * jax.lax.rsqrt(v + 1e-5)
        h = jnp.maximum(y_hat * vrow(r + 1, n_units) + vrow(r + 2, n_units), 0.0)
        r += 3

    # Output layer: Linear into a lane-dense 128-wide padded tile.
    o_ref[...] = linear(h, w_refs[n_layers], vrow(r, _OUT_PAD))


def mlpb_forward(params, x, n_layers, n_units, n_classes):
    B = x.shape[0]
    h = x.reshape(B, -1)  # nn.Flatten on NCHW (row-major, matches PyTorch)

    inputs = [h, params["w0"]]
    for i in range(1, n_layers):
        inputs.append(params[f"w{i}"])
    inputs += [params["w_out_pad"], params["vecs"]]

    in_dim = h.shape[1]
    in_bytes = sum(int(a.size) * a.dtype.itemsize for a in inputs)
    out_bytes = B * _OUT_PAD * 4
    flops = 2 * B * (in_dim * n_units
                     + (n_layers - 1) * n_units * n_units
                     + n_units * _OUT_PAD)

    out_pad = pl.pallas_call(
        functools.partial(_fused_mlpb_kernel, n_layers=n_layers, n_units=n_units),
        out_shape=jax.ShapeDtypeStruct((B, _OUT_PAD), jnp.float32),
        in_specs=[pl.BlockSpec(memory_space=pltpu.MemorySpace.VMEM)] * len(inputs),
        out_specs=pl.BlockSpec(memory_space=pltpu.MemorySpace.VMEM),
        cost_estimate=pl.CostEstimate(
            flops=flops,
            transcendentals=(n_layers - 1) * n_units,   # rsqrt per BN feature
            bytes_accessed=in_bytes + out_bytes),
        compiler_params=pltpu.CompilerParams(
            # operands + output + small margin for activations / compiler scratch
            vmem_limit_bytes=int(in_bytes + out_bytes + (8 << 20))),
    )(*inputs)

    return out_pad[:, :n_classes]


# ---------------------------------------------------------------------------
# Parameter construction (mirrors PyTorch nn.Linear default init shapes).
# Weights stored bf16 (HBM-bandwidth win); biases / BN params packed f32.
# ---------------------------------------------------------------------------
def init_mlpb_params(key, n_layers, n_units, n_channels, n_classes=10):
    params = {}
    in_dim = 32 * 32 * n_channels
    pack_w = max(n_units, _OUT_PAD)

    def pad_row(v):
        return jnp.zeros((pack_w,), jnp.float32).at[:v.shape[0]].set(v)

    def linear_init(k, fan_in, fan_out):
        kw, kb = jax.random.split(k)
        bound = 1.0 / math.sqrt(fan_in)
        w = jax.random.uniform(kw, (fan_in, fan_out), jnp.float32, -bound, bound)
        b = jax.random.uniform(kb, (fan_out,), jnp.float32, -bound, bound)
        return w.astype(jnp.bfloat16), b

    keys = jax.random.split(key, n_layers + 1)
    rows = []

    w0, b0 = linear_init(keys[0], in_dim, n_units)
    params["w0"] = w0
    rows.append(pad_row(b0))

    for i in range(1, n_layers):
        w, b = linear_init(keys[i], n_units, n_units)
        params[f"w{i}"] = w
        rows.append(pad_row(b))                                   # bias
        rows.append(pad_row(jnp.ones((n_units,), jnp.float32)))   # gamma
        rows.append(pad_row(jnp.zeros((n_units,), jnp.float32)))  # beta

    w_out, b_out = linear_init(keys[n_layers], n_units, n_classes)
    # Zero-pad final Linear to a lane-dense 128-wide output tile.
    params["w_out_pad"] = (
        jnp.zeros((n_units, _OUT_PAD), jnp.bfloat16).at[:, :n_classes].set(w_out))
    rows.append(pad_row(jnp.zeros((_OUT_PAD,), jnp.float32).at[:n_classes].set(b_out)))

    params["vecs"] = jnp.stack(rows, axis=0)   # (1 + 3*(L-1) + 1, pack_w) f32
    return params


# ---------------------------------------------------------------------------
# Pure-JAX reference mirroring the kernel math exactly (bf16 dots, f32 accum).
# ---------------------------------------------------------------------------
def mlpb_reference(params, x, n_layers, n_units, n_classes):
    B = x.shape[0]
    vec = params["vecs"]

    def dot_bf16(h, w):
        return jnp.dot(h.astype(jnp.bfloat16), w,
                       preferred_element_type=jnp.float32)

    h = x.reshape(B, -1)
    h = jnp.maximum(dot_bf16(h, params["w0"]) + vec[0:1, :n_units], 0.0)
    r = 1
    for i in range(1, n_layers):
        y = dot_bf16(h, params[f"w{i}"]) + vec[r:r + 1, :n_units]
        m = jnp.mean(y, axis=0, keepdims=True)
        v = jnp.mean((y - m) ** 2, axis=0, keepdims=True)
        y_hat = (y - m) * jax.lax.rsqrt(v + 1e-5)
        h = jnp.maximum(y_hat * vec[r + 1:r + 2, :n_units]
                        + vec[r + 2:r + 3, :n_units], 0.0)
        r += 3
    out = dot_bf16(h, params["w_out_pad"]) + vec[r:r + 1, :_OUT_PAD]
    return out[:, :n_classes]


if __name__ == "__main__":
    # Spatial size is fixed at 32x32 by the module (Linear(32*32*n_channels, .)).
    n_layers, n_units, n_channels, n_classes = 3, 128, 3, 10
    B = 8  # BatchNorm1d training-mode stats need B >= 2; 8 = one sublane tile

    key = jax.random.PRNGKey(0)
    k_param, k_x = jax.random.split(key)
    params = init_mlpb_params(k_param, n_layers, n_units, n_channels, n_classes)
    x = jax.random.normal(k_x, (B, n_channels, 32, 32), jnp.float32)  # NCHW

    logits = mlpb_forward(params, x, n_layers, n_units, n_classes)
    logits = jax.block_until_ready(logits)

    ref = mlpb_reference(params, x, n_layers, n_units, n_classes)
    assert logits.shape == (B, n_classes)
    assert jnp.allclose(logits, ref, atol=2e-3, rtol=2e-3), "mismatch vs reference"

    print("KERNEL_OK")
</pallas_src>

<mosaic_0001>
module attributes {stable_mosaic.version = 11 : i64} {
  func.func @_fused_mlpb_kernel(%arg0: memref<8x3072xf32, #tpu.memory_space<vmem>>, %arg1: memref<3072x128xbf16, #tpu.memory_space<vmem>>, %arg2: memref<128x128xbf16, #tpu.memory_space<vmem>>, %arg3: memref<128x128xbf16, #tpu.memory_space<vmem>>, %arg4: memref<128x128xbf16, #tpu.memory_space<vmem>>, %arg5: memref<8x128xf32, #tpu.memory_space<vmem>>, %arg6: memref<8x128xf32, #tpu.memory_space<vmem>>) attributes {dimension_semantics = [], scalar_prefetch = 0 : i64, scratch_operands = 0 : i64, tpu.core_type = #tpu.core_type<tc>} {
    %c0 = arith.constant 0 : index
    %c0_0 = arith.constant 0 : index
    %0 = vector.load %arg0[%c0, %c0_0] : memref<8x3072xf32, #tpu.memory_space<vmem>>, vector<8x3072xf32>
    %c0_1 = arith.constant 0 : index
    %c0_2 = arith.constant 0 : index
    %1 = vector.load %arg5[%c0_1, %c0_2] : memref<8x128xf32, #tpu.memory_space<vmem>>, vector<1x128xf32>
    %2 = arith.truncf %0 : vector<8x3072xf32> to vector<8x3072xbf16>
    %c0_3 = arith.constant 0 : index
    %c0_4 = arith.constant 0 : index
    %3 = vector.load %arg1[%c0_3, %c0_4] : memref<3072x128xbf16, #tpu.memory_space<vmem>>, vector<3072x128xbf16>
    %cst = arith.constant dense<0.000000e+00> : vector<8x128xf32>
    %4 = tpu.matmul %2, %3, %cst {dimension_numbers = #tpu.dot_dimension_numbers<[1], [0], [0], [1], [0, 0, 1, 1], [], []>} : vector<8x3072xbf16>, vector<3072x128xbf16>, vector<8x128xf32> -> vector<8x128xf32>
    %5 = vector.broadcast %1 : vector<1x128xf32> to vector<8x128xf32>
    %6 = arith.addf %4, %5 : vector<8x128xf32>
    %cst_5 = arith.constant 0.000000e+00 : f32
    %7 = vector.broadcast %cst_5 : f32 to vector<8x128xf32>
    %8 = arith.maximumf %6, %7 : vector<8x128xf32>
    %c1 = arith.constant 1 : index
    %c0_6 = arith.constant 0 : index
    %9 = vector.load %arg5[%c1, %c0_6] : memref<8x128xf32, #tpu.memory_space<vmem>>, vector<1x128xf32>
    %10 = arith.truncf %8 : vector<8x128xf32> to vector<8x128xbf16>
    %c0_7 = arith.constant 0 : index
    %c0_8 = arith.constant 0 : index
    %11 = vector.load %arg2[%c0_7, %c0_8] : memref<128x128xbf16, #tpu.memory_space<vmem>>, vector<128x128xbf16>
    %cst_9 = arith.constant dense<0.000000e+00> : vector<8x128xf32>
    %12 = tpu.matmul %10, %11, %cst_9 {dimension_numbers = #tpu.dot_dimension_numbers<[1], [0], [0], [1], [0, 0, 1, 1], [], []>} : vector<8x128xbf16>, vector<128x128xbf16>, vector<8x128xf32> -> vector<8x128xf32>
    %13 = vector.broadcast %9 : vector<1x128xf32> to vector<8x128xf32>
    %14 = arith.addf %12, %13 : vector<8x128xf32>
    %cst_10 = arith.constant dense<0.000000e+00> : vector<128xf32>
    %15 = vector.multi_reduction <add>, %14, %cst_10 [0] : vector<8x128xf32> to vector<128xf32>
    %16 = vector.shape_cast %15 : vector<128xf32> to vector<1x128xf32>
    %cst_11 = arith.constant 8.000000e+00 : f32
    %17 = vector.broadcast %cst_11 : f32 to vector<1x128xf32>
    %18 = arith.divf %16, %17 : vector<1x128xf32>
    %19 = vector.broadcast %18 : vector<1x128xf32> to vector<8x128xf32>
    %20 = arith.subf %14, %19 : vector<8x128xf32>
    %21 = arith.mulf %20, %20 : vector<8x128xf32>
    %cst_12 = arith.constant dense<0.000000e+00> : vector<128xf32>
    %22 = vector.multi_reduction <add>, %21, %cst_12 [0] : vector<8x128xf32> to vector<128xf32>
    %23 = vector.shape_cast %22 : vector<128xf32> to vector<1x128xf32>
    %cst_13 = arith.constant 8.000000e+00 : f32
    %24 = vector.broadcast %cst_13 : f32 to vector<1x128xf32>
    %25 = arith.divf %23, %24 : vector<1x128xf32>
    %cst_14 = arith.constant 9.99999974E-6 : f32
    %26 = vector.broadcast %cst_14 : f32 to vector<1x128xf32>
    %27 = arith.addf %25, %26 : vector<1x128xf32>
    %28 = math.rsqrt %27 : vector<1x128xf32>
    %29 = vector.broadcast %28 : vector<1x128xf32> to vector<8x128xf32>
    %30 = arith.mulf %20, %29 : vector<8x128xf32>
    %c2 = arith.constant 2 : index
    %c0_15 = arith.constant 0 : index
    %31 = vector.load %arg5[%c2, %c0_15] : memref<8x128xf32, #tpu.memory_space<vmem>>, vector<1x128xf32>
    %32 = vector.broadcast %31 : vector<1x128xf32> to vector<8x128xf32>
    %33 = arith.mulf %30, %32 : vector<8x128xf32>
    %c3 = arith.constant 3 : index
    %c0_16 = arith.constant 0 : index
    %34 = vector.load %arg5[%c3, %c0_16] : memref<8x128xf32, #tpu.memory_space<vmem>>, vector<1x128xf32>
    %35 = vector.broadcast %34 : vector<1x128xf32> to vector<8x128xf32>
    %36 = arith.addf %33, %35 : vector<8x128xf32>
    %cst_17 = arith.constant 0.000000e+00 : f32
    %37 = vector.broadcast %cst_17 : f32 to vector<8x128xf32>
    %38 = arith.maximumf %36, %37 : vector<8x128xf32>
    %c4 = arith.constant 4 : index
    %c0_18 = arith.constant 0 : index
    %39 = vector.load %arg5[%c4, %c0_18] : memref<8x128xf32, #tpu.memory_space<vmem>>, vector<1x128xf32>
    %40 = arith.truncf %38 : vector<8x128xf32> to vector<8x128xbf16>
    %c0_19 = arith.constant 0 : index
    %c0_20 = arith.constant 0 : index
    %41 = vector.load %arg3[%c0_19, %c0_20] : memref<128x128xbf16, #tpu.memory_space<vmem>>, vector<128x128xbf16>
    %cst_21 = arith.constant dense<0.000000e+00> : vector<8x128xf32>
    %42 = tpu.matmul %40, %41, %cst_21 {dimension_numbers = #tpu.dot_dimension_numbers<[1], [0], [0], [1], [0, 0, 1, 1], [], []>} : vector<8x128xbf16>, vector<128x128xbf16>, vector<8x128xf32> -> vector<8x128xf32>
    %43 = vector.broadcast %39 : vector<1x128xf32> to vector<8x128xf32>
    %44 = arith.addf %42, %43 : vector<8x128xf32>
    %cst_22 = arith.constant dense<0.000000e+00> : vector<128xf32>
    %45 = vector.multi_reduction <add>, %44, %cst_22 [0] : vector<8x128xf32> to vector<128xf32>
    %46 = vector.shape_cast %45 : vector<128xf32> to vector<1x128xf32>
    %cst_23 = arith.constant 8.000000e+00 : f32
    %47 = vector.broadcast %cst_23 : f32 to vector<1x128xf32>
    %48 = arith.divf %46, %47 : vector<1x128xf32>
    %49 = vector.broadcast %48 : vector<1x128xf32> to vector<8x128xf32>
    %50 = arith.subf %44, %49 : vector<8x128xf32>
    %51 = arith.mulf %50, %50 : vector<8x128xf32>
    %cst_24 = arith.constant dense<0.000000e+00> : vector<128xf32>
    %52 = vector.multi_reduction <add>, %51, %cst_24 [0] : vector<8x128xf32> to vector<128xf32>
    %53 = vector.shape_cast %52 : vector<128xf32> to vector<1x128xf32>
    %cst_25 = arith.constant 8.000000e+00 : f32
    %54 = vector.broadcast %cst_25 : f32 to vector<1x128xf32>
    %55 = arith.divf %53, %54 : vector<1x128xf32>
    %cst_26 = arith.constant 9.99999974E-6 : f32
    %56 = vector.broadcast %cst_26 : f32 to vector<1x128xf32>
    %57 = arith.addf %55, %56 : vector<1x128xf32>
    %58 = math.rsqrt %57 : vector<1x128xf32>
    %59 = vector.broadcast %58 : vector<1x128xf32> to vector<8x128xf32>
    %60 = arith.mulf %50, %59 : vector<8x128xf32>
    %c5 = arith.constant 5 : index
    %c0_27 = arith.constant 0 : index
    %61 = vector.load %arg5[%c5, %c0_27] : memref<8x128xf32, #tpu.memory_space<vmem>>, vector<1x128xf32>
    %62 = vector.broadcast %61 : vector<1x128xf32> to vector<8x128xf32>
    %63 = arith.mulf %60, %62 : vector<8x128xf32>
    %c6 = arith.constant 6 : index
    %c0_28 = arith.constant 0 : index
    %64 = vector.load %arg5[%c6, %c0_28] : memref<8x128xf32, #tpu.memory_space<vmem>>, vector<1x128xf32>
    %65 = vector.broadcast %64 : vector<1x128xf32> to vector<8x128xf32>
    %66 = arith.addf %63, %65 : vector<8x128xf32>
    %cst_29 = arith.constant 0.000000e+00 : f32
    %67 = vector.broadcast %cst_29 : f32 to vector<8x128xf32>
    %68 = arith.maximumf %66, %67 : vector<8x128xf32>
    %c7 = arith.constant 7 : index
    %c0_30 = arith.constant 0 : index
    %69 = vector.load %arg5[%c7, %c0_30] : memref<8x128xf32, #tpu.memory_space<vmem>>, vector<1x128xf32>
    %70 = arith.truncf %68 : vector<8x128xf32> to vector<8x128xbf16>
    %c0_31 = arith.constant 0 : index
    %c0_32 = arith.constant 0 : index
    %71 = vector.load %arg4[%c0_31, %c0_32] : memref<128x128xbf16, #tpu.memory_space<vmem>>, vector<128x128xbf16>
    %cst_33 = arith.constant dense<0.000000e+00> : vector<8x128xf32>
    %72 = tpu.matmul %70, %71, %cst_33 {dimension_numbers = #tpu.dot_dimension_numbers<[1], [0], [0], [1], [0, 0, 1, 1], [], []>} : vector<8x128xbf16>, vector<128x128xbf16>, vector<8x128xf32> -> vector<8x128xf32>
    %73 = vector.broadcast %69 : vector<1x128xf32> to vector<8x128xf32>
    %74 = arith.addf %72, %73 : vector<8x128xf32>
    %c0_34 = arith.constant 0 : index
    %c0_35 = arith.constant 0 : index
    %75 = vector.load %arg6[%c0_34, %c0_35] : memref<8x128xf32, #tpu.memory_space<vmem>>, vector<8x128xf32>
    tpu.vector_store %arg6[%c0_34, %c0_35], %74 {strides = array<i32>} : memref<8x128xf32, #tpu.memory_space<vmem>>, vector<8x128xf32>,
    return
  }
}

</mosaic_0001>

<llo_original>
// kernel: tpu_custom_call.1
$region0: #{tpu_custom_call.1}
  #allocation0 [shape = 'u32[]', space=smem, size = 0x4, offset = 0x4, fixed_abs, tag = 'smem constant byte address 0x4 - core index']
  #allocation1 [shape = 'u32[144,128]{1,0:T(1,128)}', space=vmem, size = 0x12000, scoped, tag = 'internal scratch']
  %s0 = inlined_call_operand.hbm [shape: f32[8,3072], index: 0, kind: input, shape index: {}]
  %s1 = inlined_call_operand.hbm [shape: bf16[3072,128], index: 1, kind: input, shape index: {}]
  %s2 = inlined_call_operand.hbm [shape: bf16[128,128], index: 2, kind: input, shape index: {}]
  %s3 = inlined_call_operand.hbm [shape: bf16[128,128], index: 3, kind: input, shape index: {}]
  %s4 = inlined_call_operand.hbm [shape: bf16[128,128], index: 4, kind: input, shape index: {}]
  %s5 = inlined_call_operand.vmem [shape: f32[8,128], index: 5, kind: input, shape index: {}]
  %s6 = inlined_call_operand.hbm [shape: f32[8,128], index: 6, kind: output, shape index: {}]
  %s7 = sld [smem:[#allocation0]]
  $region54: #{tpu_custom_call.1} parent=0
    _
  %s9 = ssub.s32 1, %s7
  %s10 = scalar_select 0, %s9, %s7
  $region1: #{tpu_custom_call.1} parent=0
    #allocation2 [shape = 'u8[98304]{0}', space=vmem, size = 0x18000, scoped, tag = 'input window, operand 0, single buffered']
    #allocation3 [shape = 's32[1]{0}', space=sflag, size = 0x4, scoped, tag = 'scoped memory for tpu_custom_call.1']
    #allocation4 [shape = 's32[1]{0}', space=sflag, size = 0x4, scoped, tag = 'scoped memory for tpu_custom_call.1']
    #allocation5 [shape = 'u8[786432]{0}', space=vmem, size = 0xc0000, scoped, tag = 'input window, operand 1, single buffered']
    #allocation6 [shape = 's32[1]{0}', space=sflag, size = 0x4, scoped, tag = 'scoped memory for tpu_custom_call.1']
    #allocation7 [shape = 'u8[32768]{0}', space=vmem, size = 0x8000, scoped, tag = 'input window, operand 2, single buffered']
    #allocation8 [shape = 'u8[32768]{0}', space=vmem, size = 0x8000, scoped, tag = 'input window, operand 3, single buffered']
    #allocation9 [shape = 's32[1]{0}', space=sflag, size = 0x4, scoped, tag = 'scoped memory for tpu_custom_call.1']
    #allocation10 [shape = 'u8[32768]{0}', space=vmem, size = 0x8000, scoped, tag = 'input window, operand 4, single buffered']
    #allocation11 [shape = 'u8[4096]{0}', space=vmem, size = 0x1000, scoped, tag = 'output window, operand 0, single buffered']
    %11 = vsyncpa [#allocation3], 0
    %12 = vsyncpa [#allocation6], 0
    %13 = vsyncpa [#allocation9], 0
    %14 = vsyncpa [#allocation4], 0
    // Predicated region
    $region2: #{tpu_custom_call.1} parent=1 // pred_check
      _
    $region3: #{tpu_custom_call.1} parent=1 // pred_check_branch
      %16 = sbr.rel (0) target = $region5
    $region4: #{tpu_custom_call.1} parent=1 // pred_region
      %s18 = ssub.s32 3072, 3072
      %19 = vsyncadd [#allocation3], %s18
      %s21 = sshll.u32 [#allocation2], 4
      %s22 = int_to_ptr.vmem [resolvable:$true] %s21
      %24 = dma.hbm_to_vmem [thread:$0]  %s0, 3072, %s22, [#allocation3]
    $region5: #{tpu_custom_call.1} parent=1 // pred_fallthru
      _
    // Predicated region
    $region6: #{tpu_custom_call.1} parent=1 // pred_check
      _
    $region7: #{tpu_custom_call.1} parent=1 // pred_check_branch
      %26 = sbr.rel (0) target = $region9
    $region8: #{tpu_custom_call.1} parent=1 // pred_region
      %s28 = ssub.s32 24576, 24576
      %29 = vsyncadd [#allocation6], %s28
      %s30 = sshll.u32 [#allocation5], 4
      %s31 = int_to_ptr.vmem [resolvable:$true] %s30
      %36 = dma.hbm_to_vmem [thread:$0]  %s1, 24576, %s31, [#allocation6], 64, 64, 4
    $region9: #{tpu_custom_call.1} parent=1 // pred_fallthru
      _
    // Predicated region
    $region10: #{tpu_custom_call.1} parent=1 // pred_check
      _
    $region11: #{tpu_custom_call.1} parent=1 // pred_check_branch
      %38 = sbr.rel (0) target = $region13
    $region12: #{tpu_custom_call.1} parent=1 // pred_region
      %s40 = ssub.s32 1024, 1024
      %41 = vsyncadd [#allocation6], %s40
      %s42 = sshll.u32 [#allocation7], 4
      %s43 = int_to_ptr.vmem [resolvable:$true] %s42
      %48 = dma.hbm_to_vmem [thread:$0]  %s2, 1024, %s43, [#allocation6], 64, 64, 4
    $region13: #{tpu_custom_call.1} parent=1 // pred_fallthru
      _
    // Predicated region
    $region14: #{tpu_custom_call.1} parent=1 // pred_check
      _
    $region15: #{tpu_custom_call.1} parent=1 // pred_check_branch
      %50 = sbr.rel (0) target = $region17
    $region16: #{tpu_custom_call.1} parent=1 // pred_region
      %s52 = ssub.s32 1024, 1024
      %53 = vsyncadd [#allocation9], %s52
      %s54 = sshll.u32 [#allocation8], 4
      %s55 = int_to_ptr.vmem [resolvable:$true] %s54
      %60 = dma.hbm_to_vmem [thread:$0]  %s3, 1024, %s55, [#allocation9], 64, 64, 4
    $region17: #{tpu_custom_call.1} parent=1 // pred_fallthru
      _
    // Predicated region
    $region18: #{tpu_custom_call.1} parent=1 // pred_check
      _
    $region19: #{tpu_custom_call.1} parent=1 // pred_check_branch
      %62 = sbr.rel (0) target = $region21
    $region20: #{tpu_custom_call.1} parent=1 // pred_region
      %s64 = ssub.s32 1024, 1024
      %65 = vsyncadd [#allocation9], %s64
      %s66 = sshll.u32 [#allocation10], 4
      %s67 = int_to_ptr.vmem [resolvable:$true] %s66
      %72 = dma.hbm_to_vmem [thread:$0]  %s4, 1024, %s67, [#allocation9], 64, 64, 4
    $region21: #{tpu_custom_call.1} parent=1 // pred_fallthru
      _
    // Predicated region
    $region22: #{tpu_custom_call.1} parent=1 // pred_check
      _
    $region23: #{tpu_custom_call.1} parent=1 // pred_check_branch
      %74 = sbr.rel (0) target = $region25
    $region24: #{tpu_custom_call.1} parent=1 // pred_region
      _
    $region25: #{tpu_custom_call.1} parent=1 // pred_fallthru
      _
    // Predicated region
    $region26: #{tpu_custom_call.1} parent=1 // pred_check
      _
    $region27: #{tpu_custom_call.1} parent=1 // pred_check_branch
      %76 = sbr.rel (0) target = $region29
    $region28: #{tpu_custom_call.1} parent=1 // pred_region
      %77 = dma.done [#allocation3], 3072
    $region29: #{tpu_custom_call.1} parent=1 // pred_fallthru
      _
    // Predicated region
    $region30: #{tpu_custom_call.1} parent=1 // pred_check
      _
    $region31: #{tpu_custom_call.1} parent=1 // pred_check_branch
      %79 = sbr.rel (0) target = $region33
    $region32: #{tpu_custom_call.1} parent=1 // pred_region
      %80 = dma.done [#allocation6], 24576
    $region33: #{tpu_custom_call.1} parent=1 // pred_fallthru
      _
    // Predicated region
    $region34: #{tpu_custom_call.1} parent=1 // pred_check
      _
    $region35: #{tpu_custom_call.1} parent=1 // pred_check_branch
      %82 = sbr.rel (0) target = $region37
    $region36: #{tpu_custom_call.1} parent=1 // pred_region
      %83 = dma.done [#allocation6], 1024
    $region37: #{tpu_custom_call.1} parent=1 // pred_fallthru
      _
    // Predicated region
    $region38: #{tpu_custom_call.1} parent=1 // pred_check
      _
    $region39: #{tpu_custom_call.1} parent=1 // pred_check_branch
      %85 = sbr.rel (0) target = $region41
    $region40: #{tpu_custom_call.1} parent=1 // pred_region
      %86 = dma.done [#allocation9], 1024
    $region41: #{tpu_custom_call.1} parent=1 // pred_fallthru
      _
    // Predicated region
    $region42: #{tpu_custom_call.1} parent=1 // pred_check
      _
    $region43: #{tpu_custom_call.1} parent=1 // pred_check_branch
      %88 = sbr.rel (0) target = $region45
    $region44: #{tpu_custom_call.1} parent=1 // pred_region
      %89 = dma.done [#allocation9], 1024
    $region45: #{tpu_custom_call.1} parent=1 // pred_fallthru
      _
    %v91 = vld [vmem:[#allocation2] sm:$0xff]
    %v92 = vld [vmem:[#allocation2 + $0x8] sm:$0xff]
    %v93 = vld [vmem:[#allocation2 + $0x10] sm:$0xff]
    %v94 = vld [vmem:[#allocation2 + $0x18] sm:$0xff]
    %v95 = vld [vmem:[#allocation2 + $0x20] sm:$0xff]
    %v96 = vld [vmem:[#allocation2 + $0x28] sm:$0xff]
    %v97 = vld [vmem:[#allocation2 + $0x30] sm:$0xff]
    %v98 = vld [vmem:[#allocation2 + $0x38] sm:$0xff]
    %v99 = vld [vmem:[#allocation2 + $0x40] sm:$0xff]
    %v100 = vld [vmem:[#allocation2 + $0x48] sm:$0xff]
    %v101 = vld [vmem:[#allocation2 + $0x50] sm:$0xff]
    %v102 = vld [vmem:[#allocation2 + $0x58] sm:$0xff]
    %v103 = vld [vmem:[#allocation2 + $0x60] sm:$0xff]
    %v104 = vld [vmem:[#allocation2 + $0x68] sm:$0xff]
    %v105 = vld [vmem:[#allocation2 + $0x70] sm:$0xff]
    %v106 = vld [vmem:[#allocation2 + $0x78] sm:$0xff]
    %v107 = vld [vmem:[#allocation2 + $0x80] sm:$0xff]
    %v108 = vld [vmem:[#allocation2 + $0x88] sm:$0xff]
    %v109 = vld [vmem:[#allocation2 + $0x90] sm:$0xff]
    %v110 = vld [vmem:[#allocation2 + $0x98] sm:$0xff]
    %v111 = vld [vmem:[#allocation2 + $0xa0] sm:$0xff]
    %v112 = vld [vmem:[#allocation2 + $0xa8] sm:$0xff]
    %v113 = vld [vmem:[#allocation2 + $0xb0] sm:$0xff]
    %v114 = vld [vmem:[#allocation2 + $0xb8] sm:$0xff]
    %v115 = vld [vmem:[%s5] sm:$0x1]
    %v116 = vpack.c.bf16 %v91, %v91
    %v117 = vpack.c.bf16 %v92, %v92
    %v118 = vpack.c.bf16 %v93, %v93
    %v119 = vpack.c.bf16 %v94, %v94
    %v120 = vpack.c.bf16 %v95, %v95
    %v121 = vpack.c.bf16 %v96, %v96
    %v122 = vpack.c.bf16 %v97, %v97
    %v123 = vpack.c.bf16 %v98, %v98
    %v124 = vpack.c.bf16 %v99, %v99
    %v125 = vpack.c.bf16 %v100, %v100
    %v126 = vpack.c.bf16 %v101, %v101
    %v127 = vpack.c.bf16 %v102, %v102
    %v128 = vpack.c.bf16 %v103, %v103
    %v129 = vpack.c.bf16 %v104, %v104
    %v130 = vpack.c.bf16 %v105, %v105
    %v131 = vpack.c.bf16 %v106, %v106
    %v132 = vpack.c.bf16 %v107, %v107
    %v133 = vpack.c.bf16 %v108, %v108
    %v134 = vpack.c.bf16 %v109, %v109
    %v135 = vpack.c.bf16 %v110, %v110
    %v136 = vpack.c.bf16 %v111, %v111
    %v137 = vpack.c.bf16 %v112, %v112
    %v138 = vpack.c.bf16 %v113, %v113
    %v139 = vpack.c.bf16 %v114, %v114
    %v140 = vld [vmem:[#allocation5] sm:$0xf]
    %v141 = vld [vmem:[#allocation5 + $0x4] sm:$0xf]
    %v142 = vld [vmem:[#allocation5 + $0x8] sm:$0xf]
    %v143 = vld [vmem:[#allocation5 + $0xc] sm:$0xf]
    %v144 = vld [vmem:[#allocation5 + $0x10] sm:$0xf]
    %v145 = vld [vmem:[#allocation5 + $0x14] sm:$0xf]
    %v146 = vld [vmem:[#allocation5 + $0x18] sm:$0xf]
    %v147 = vld [vmem:[#allocation5 + $0x1c] sm:$0xf]
    %v148 = vld [vmem:[#allocation5 + $0x20] sm:$0xf]
    %v149 = vld [vmem:[#allocation5 + $0x24] sm:$0xf]
    %v150 = vld [vmem:[#allocation5 + $0x28] sm:$0xf]
    %v151 = vld [vmem:[#allocation5 + $0x2c] sm:$0xf]
    %v152 = vld [vmem:[#allocation5 + $0x30] sm:$0xf]
    %v153 = vld [vmem:[#allocation5 + $0x34] sm:$0xf]
    %v154 = vld [vmem:[#allocation5 + $0x38] sm:$0xf]
    %v155 = vld [vmem:[#allocation5 + $0x3c] sm:$0xf]
    %v156 = vld [vmem:[#allocation5 + $0x40] sm:$0xf]
    %v157 = vld [vmem:[#allocation5 + $0x44] sm:$0xf]
    %v158 = vld [vmem:[#allocation5 + $0x48] sm:$0xf]
    %v159 = vld [vmem:[#allocation5 + $0x4c] sm:$0xf]
    %v160 = vld [vmem:[#allocation5 + $0x50] sm:$0xf]
    %v161 = vld [vmem:[#allocation5 + $0x54] sm:$0xf]
    %v162 = vld [vmem:[#allocation5 + $0x58] sm:$0xf]
    %v163 = vld [vmem:[#allocation5 + $0x5c] sm:$0xf]
    %v164 = vld [vmem:[#allocation5 + $0x60] sm:$0xf]
    %v165 = vld [vmem:[#allocation5 + $0x64] sm:$0xf]
    %v166 = vld [vmem:[#allocation5 + $0x68] sm:$0xf]
    %v167 = vld [vmem:[#allocation5 + $0x6c] sm:$0xf]
    %v168 = vld [vmem:[#allocation5 + $0x70] sm:$0xf]
    %v169 = vld [vmem:[#allocation5 + $0x74] sm:$0xf]
    %v170 = vld [vmem:[#allocation5 + $0x78] sm:$0xf]
    %v171 = vld [vmem:[#allocation5 + $0x7c] sm:$0xf]
    %v172 = vld [vmem:[#allocation5 + $0x80] sm:$0xf]
    %v173 = vld [vmem:[#allocation5 + $0x84] sm:$0xf]
    %v174 = vld [vmem:[#allocation5 + $0x88] sm:$0xf]
    %v175 = vld [vmem:[#allocation5 + $0x8c] sm:$0xf]
    %v176 = vld [vmem:[#allocation5 + $0x90] sm:$0xf]
    %v177 = vld [vmem:[#allocation5 + $0x94] sm:$0xf]
    %v178 = vld [vmem:[#allocation5 + $0x98] sm:$0xf]
    %v179 = vld [vmem:[#allocation5 + $0x9c] sm:$0xf]
    %v180 = vld [vmem:[#allocation5 + $0xa0] sm:$0xf]
    %v181 = vld [vmem:[#allocation5 + $0xa4] sm:$0xf]
    %v182 = vld [vmem:[#allocation5 + $0xa8] sm:$0xf]
    %v183 = vld [vmem:[#allocation5 + $0xac] sm:$0xf]
    %v184 = vld [vmem:[#allocation5 + $0xb0] sm:$0xf]
    %v185 = vld [vmem:[#allocation5 + $0xb4] sm:$0xf]
    %v186 = vld [vmem:[#allocation5 + $0xb8] sm:$0xf]
    %v187 = vld [vmem:[#allocation5 + $0xbc] sm:$0xf]
    %v188 = vld [vmem:[#allocation5 + $0xc0] sm:$0xf]
    %v189 = vld [vmem:[#allocation5 + $0xc4] sm:$0xf]
    %v190 = vld [vmem:[#allocation5 + $0xc8] sm:$0xf]
    %v191 = vld [vmem:[#allocation5 + $0xcc] sm:$0xf]
    %v192 = vld [vmem:[#allocation5 + $0xd0] sm:$0xf]
    %v193 = vld [vmem:[#allocation5 + $0xd4] sm:$0xf]
    %v194 = vld [vmem:[#allocation5 + $0xd8] sm:$0xf]
    %v195 = vld [vmem:[#allocation5 + $0xdc] sm:$0xf]
    %v196 = vld [vmem:[#allocation5 + $0xe0] sm:$0xf]
    %v197 = vld [vmem:[#allocation5 + $0xe4] sm:$0xf]
    %v198 = vld [vmem:[#allocation5 + $0xe8] sm:$0xf]
    %v199 = vld [vmem:[#allocation5 + $0xec] sm:$0xf]
    %v200 = vld [vmem:[#allocation5 + $0xf0] sm:$0xf]
    %v201 = vld [vmem:[#allocation5 + $0xf4] sm:$0xf]
    %v202 = vld [vmem:[#allocation5 + $0xf8] sm:$0xf]
    %v203 = vld [vmem:[#allocation5 + $0xfc] sm:$0xf]
    %v204 = vld [vmem:[#allocation5 + $0x100] sm:$0xf]
    %v205 = vld [vmem:[#allocation5 + $0x104] sm:$0xf]
    %v206 = vld [vmem:[#allocation5 + $0x108] sm:$0xf]
    %v207 = vld [vmem:[#allocation5 + $0x10c] sm:$0xf]
    %v208 = vld [vmem:[#allocation5 + $0x110] sm:$0xf]
    %v209 = vld [vmem:[#allocation5 + $0x114] sm:$0xf]
    %v210 = vld [vmem:[#allocation5 + $0x118] sm:$0xf]
    %v211 = vld [vmem:[#allocation5 + $0x11c] sm:$0xf]
    %v212 = vld [vmem:[#allocation5 + $0x120] sm:$0xf]
    %v213 = vld [vmem:[#allocation5 + $0x124] sm:$0xf]
    %v214 = vld [vmem:[#allocation5 + $0x128] sm:$0xf]
    %v215 = vld [vmem:[#allocation5 + $0x12c] sm:$0xf]
    %v216 = vld [vmem:[#allocation5 + $0x130] sm:$0xf]
    %v217 = vld [vmem:[#allocation5 + $0x134] sm:$0xf]
    %v218 = vld [vmem:[#allocation5 + $0x138] sm:$0xf]
    %v219 = vld [vmem:[#allocation5 + $0x13c] sm:$0xf]
    %v220 = vld [vmem:[#allocation5 + $0x140] sm:$0xf]
    %v221 = vld [vmem:[#allocation5 + $0x144] sm:$0xf]
    %v222 = vld [vmem:[#allocation5 + $0x148] sm:$0xf]
    %v223 = vld [vmem:[#allocation5 + $0x14c] sm:$0xf]
    %v224 = vld [vmem:[#allocation5 + $0x150] sm:$0xf]
    %v225 = vld [vmem:[#allocation5 + $0x154] sm:$0xf]
    %v226 = vld [vmem:[#allocation5 + $0x158] sm:$0xf]
    %v227 = vld [vmem:[#allocation5 + $0x15c] sm:$0xf]
    %v228 = vld [vmem:[#allocation5 + $0x160] sm:$0xf]
    %v229 = vld [vmem:[#allocation5 + $0x164] sm:$0xf]
    %v230 = vld [vmem:[#allocation5 + $0x168] sm:$0xf]
    %v231 = vld [vmem:[#allocation5 + $0x16c] sm:$0xf]
    %v232 = vld [vmem:[#allocation5 + $0x170] sm:$0xf]
    %v233 = vld [vmem:[#allocation5 + $0x174] sm:$0xf]
    %v234 = vld [vmem:[#allocation5 + $0x178] sm:$0xf]
    %v235 = vld [vmem:[#allocation5 + $0x17c] sm:$0xf]
    %v236 = vld [vmem:[#allocation5 + $0x180] sm:$0xf]
    %v237 = vld [vmem:[#allocation5 + $0x184] sm:$0xf]
    %v238 = vld [vmem:[#allocation5 + $0x188] sm:$0xf]
    %v239 = vld [vmem:[#allocation5 + $0x18c] sm:$0xf]
    %v240 = vld [vmem:[#allocation5 + $0x190] sm:$0xf]
    %v241 = vld [vmem:[#allocation5 + $0x194] sm:$0xf]
    %v242 = vld [vmem:[#allocation5 + $0x198] sm:$0xf]
    %v243 = vld [vmem:[#allocation5 + $0x19c] sm:$0xf]
    %v244 = vld [vmem:[#allocation5 + $0x1a0] sm:$0xf]
    %v245 = vld [vmem:[#allocation5 + $0x1a4] sm:$0xf]
    %v246 = vld [vmem:[#allocation5 + $0x1a8] sm:$0xf]
    %v247 = vld [vmem:[#allocation5 + $0x1ac] sm:$0xf]
    %v248 = vld [vmem:[#allocation5 + $0x1b0] sm:$0xf]
    %v249 = vld [vmem:[#allocation5 + $0x1b4] sm:$0xf]
    %v250 = vld [vmem:[#allocation5 + $0x1b8] sm:$0xf]
    %v251 = vld [vmem:[#allocation5 + $0x1bc] sm:$0xf]
    %v252 = vld [vmem:[#allocation5 + $0x1c0] sm:$0xf]
    %v253 = vld [vmem:[#allocation5 + $0x1c4] sm:$0xf]
    %v254 = vld [vmem:[#allocation5 + $0x1c8] sm:$0xf]
    %v255 = vld [vmem:[#allocation5 + $0x1cc] sm:$0xf]
    %v256 = vld [vmem:[#allocation5 + $0x1d0] sm:$0xf]
    %v257 = vld [vmem:[#allocation5 + $0x1d4] sm:$0xf]
    %v258 = vld [vmem:[#allocation5 + $0x1d8] sm:$0xf]
    %v259 = vld [vmem:[#allocation5 + $0x1dc] sm:$0xf]
    %v260 = vld [vmem:[#allocation5 + $0x1e0] sm:$0xf]
    %v261 = vld [vmem:[#allocation5 + $0x1e4] sm:$0xf]
    %v262 = vld [vmem:[#allocation5 + $0x1e8] sm:$0xf]
    %v263 = vld [vmem:[#allocation5 + $0x1ec] sm:$0xf]
    %v264 = vld [vmem:[#allocation5 + $0x1f0] sm:$0xf]
    %v265 = vld [vmem:[#allocation5 + $0x1f4] sm:$0xf]
    %v266 = vld [vmem:[#allocation5 + $0x1f8] sm:$0xf]
    %v267 = vld [vmem:[#allocation5 + $0x1fc] sm:$0xf]
    %v268 = vld [vmem:[#allocation5 + $0x200] sm:$0xf]
    %v269 = vld [vmem:[#allocation5 + $0x204] sm:$0xf]
    %v270 = vld [vmem:[#allocation5 + $0x208] sm:$0xf]
    %v271 = vld [vmem:[#allocation5 + $0x20c] sm:$0xf]
    %v272 = vld [vmem:[#allocation5 + $0x210] sm:$0xf]
    %v273 = vld [vmem:[#allocation5 + $0x214] sm:$0xf]
    %v274 = vld [vmem:[#allocation5 + $0x218] sm:$0xf]
    %v275 = vld [vmem:[#allocation5 + $0x21c] sm:$0xf]
    %v276 = vld [vmem:[#allocation5 + $0x220] sm:$0xf]
    %v277 = vld [vmem:[#allocation5 + $0x224] sm:$0xf]
    %v278 = vld [vmem:[#allocation5 + $0x228] sm:$0xf]
    %v279 = vld [vmem:[#allocation5 + $0x22c] sm:$0xf]
    %v280 = vld [vmem:[#allocation5 + $0x230] sm:$0xf]
    %v281 = vld [vmem:[#allocation5 + $0x234] sm:$0xf]
    %v282 = vld [vmem:[#allocation5 + $0x238] sm:$0xf]
    %v283 = vld [vmem:[#allocation5 + $0x23c] sm:$0xf]
    %v284 = vld [vmem:[#allocation5 + $0x240] sm:$0xf]
    %v285 = vld [vmem:[#allocation5 + $0x244] sm:$0xf]
    %v286 = vld [vmem:[#allocation5 + $0x248] sm:$0xf]
    %v287 = vld [vmem:[#allocation5 + $0x24c] sm:$0xf]
    %v288 = vld [vmem:[#allocation5 + $0x250] sm:$0xf]
    %v289 = vld [vmem:[#allocation5 + $0x254] sm:$0xf]
    %v290 = vld [vmem:[#allocation5 + $0x258] sm:$0xf]
    %v291 = vld [vmem:[#allocation5 + $0x25c] sm:$0xf]
    %v292 = vld [vmem:[#allocation5 + $0x260] sm:$0xf]
    %v293 = vld [vmem:[#allocation5 + $0x264] sm:$0xf]
    %v294 = vld [vmem:[#allocation5 + $0x268] sm:$0xf]
    %v295 = vld [vmem:[#allocation5 + $0x26c] sm:$0xf]
    %v296 = vld [vmem:[#allocation5 + $0x270] sm:$0xf]
    %v297 = vld [vmem:[#allocation5 + $0x274] sm:$0xf]
    %v298 = vld [vmem:[#allocation5 + $0x278] sm:$0xf]
    %v299 = vld [vmem:[#allocation5 + $0x27c] sm:$0xf]
    %v300 = vld [vmem:[#allocation5 + $0x280] sm:$0xf]
    %v301 = vld [vmem:[#allocation5 + $0x284] sm:$0xf]
    %v302 = vld [vmem:[#allocation5 + $0x288] sm:$0xf]
    %v303 = vld [vmem:[#allocation5 + $0x28c] sm:$0xf]
    %v304 = vld [vmem:[#allocation5 + $0x290] sm:$0xf]
    %v305 = vld [vmem:[#allocation5 + $0x294] sm:$0xf]
    %v306 = vld [vmem:[#allocation5 + $0x298] sm:$0xf]
    %v307 = vld [vmem:[#allocation5 + $0x29c] sm:$0xf]
    %v308 = vld [vmem:[#allocation5 + $0x2a0] sm:$0xf]
    %v309 = vld [vmem:[#allocation5 + $0x2a4] sm:$0xf]
    %v310 = vld [vmem:[#allocation5 + $0x2a8] sm:$0xf]
    %v311 = vld [vmem:[#allocation5 + $0x2ac] sm:$0xf]
    %v312 = vld [vmem:[#allocation5 + $0x2b0] sm:$0xf]
    %v313 = vld [vmem:[#allocation5 + $0x2b4] sm:$0xf]
    %v314 = vld [vmem:[#allocation5 + $0x2b8] sm:$0xf]
    %v315 = vld [vmem:[#allocation5 + $0x2bc] sm:$0xf]
    %v316 = vld [vmem:[#allocation5 + $0x2c0] sm:$0xf]
    %v317 = vld [vmem:[#allocation5 + $0x2c4] sm:$0xf]
    %v318 = vld [vmem:[#allocation5 + $0x2c8] sm:$0xf]
    %v319 = vld [vmem:[#allocation5 + $0x2cc] sm:$0xf]
    %v320 = vld [vmem:[#allocation5 + $0x2d0] sm:$0xf]
    %v321 = vld [vmem:[#allocation5 + $0x2d4] sm:$0xf]
    %v322 = vld [vmem:[#allocation5 + $0x2d8] sm:$0xf]
    %v323 = vld [vmem:[#allocation5 + $0x2dc] sm:$0xf]
    %v324 = vld [vmem:[#allocation5 + $0x2e0] sm:$0xf]
    %v325 = vld [vmem:[#allocation5 + $0x2e4] sm:$0xf]
    %v326 = vld [vmem:[#allocation5 + $0x2e8] sm:$0xf]
    %v327 = vld [vmem:[#allocation5 + $0x2ec] sm:$0xf]
    %v328 = vld [vmem:[#allocation5 + $0x2f0] sm:$0xf]
    %v329 = vld [vmem:[#allocation5 + $0x2f4] sm:$0xf]
    %v330 = vld [vmem:[#allocation5 + $0x2f8] sm:$0xf]
    %v331 = vld [vmem:[#allocation5 + $0x2fc] sm:$0xf]
    %v332 = vld [vmem:[#allocation5 + $0x300] sm:$0xf]
    %v333 = vld [vmem:[#allocation5 + $0x304] sm:$0xf]
    %v334 = vld [vmem:[#allocation5 + $0x308] sm:$0xf]
    %v335 = vld [vmem:[#allocation5 + $0x30c] sm:$0xf]
    %v336 = vld [vmem:[#allocation5 + $0x310] sm:$0xf]
    %v337 = vld [vmem:[#allocation5 + $0x314] sm:$0xf]
    %v338 = vld [vmem:[#allocation5 + $0x318] sm:$0xf]
    %v339 = vld [vmem:[#allocation5 + $0x31c] sm:$0xf]
    %v340 = vld [vmem:[#allocation5 + $0x320] sm:$0xf]
    %v341 = vld [vmem:[#allocation5 + $0x324] sm:$0xf]
    %v342 = vld [vmem:[#allocation5 + $0x328] sm:$0xf]
    %v343 = vld [vmem:[#allocation5 + $0x32c] sm:$0xf]
    %v344 = vld [vmem:[#allocation5 + $0x330] sm:$0xf]
    %v345 = vld [vmem:[#allocation5 + $0x334] sm:$0xf]
    %v346 = vld [vmem:[#allocation5 + $0x338] sm:$0xf]
    %v347 = vld [vmem:[#allocation5 + $0x33c] sm:$0xf]
    %v348 = vld [vmem:[#allocation5 + $0x340] sm:$0xf]
    %v349 = vld [vmem:[#allocation5 + $0x344] sm:$0xf]
    %v350 = vld [vmem:[#allocation5 + $0x348] sm:$0xf]
    %v351 = vld [vmem:[#allocation5 + $0x34c] sm:$0xf]
    %v352 = vld [vmem:[#allocation5 + $0x350] sm:$0xf]
    %v353 = vld [vmem:[#allocation5 + $0x354] sm:$0xf]
    %v354 = vld [vmem:[#allocation5 + $0x358] sm:$0xf]
    %v355 = vld [vmem:[#allocation5 + $0x35c] sm:$0xf]
    %v356 = vld [vmem:[#allocation5 + $0x360] sm:$0xf]
    %v357 = vld [vmem:[#allocation5 + $0x364] sm:$0xf]
    %v358 = vld [vmem:[#allocation5 + $0x368] sm:$0xf]
    %v359 = vld [vmem:[#allocation5 + $0x36c] sm:$0xf]
    %v360 = vld [vmem:[#allocation5 + $0x370] sm:$0xf]
    %v361 = vld [vmem:[#allocation5 + $0x374] sm:$0xf]
    %v362 = vld [vmem:[#allocation5 + $0x378] sm:$0xf]
    %v363 = vld [vmem:[#allocation5 + $0x37c] sm:$0xf]
    %v364 = vld [vmem:[#allocation5 + $0x380] sm:$0xf]
    %v365 = vld [vmem:[#allocation5 + $0x384] sm:$0xf]
    %v366 = vld [vmem:[#allocation5 + $0x388] sm:$0xf]
    %v367 = vld [vmem:[#allocation5 + $0x38c] sm:$0xf]
    %v368 = vld [vmem:[#allocation5 + $0x390] sm:$0xf]
    %v369 = vld [vmem:[#allocation5 + $0x394] sm:$0xf]
    %v370 = vld [vmem:[#allocation5 + $0x398] sm:$0xf]
    %v371 = vld [vmem:[#allocation5 + $0x39c] sm:$0xf]
    %v372 = vld [vmem:[#allocation5 + $0x3a0] sm:$0xf]
    %v373 = vld [vmem:[#allocation5 + $0x3a4] sm:$0xf]
    %v374 = vld [vmem:[#allocation5 + $0x3a8] sm:$0xf]
    %v375 = vld [vmem:[#allocation5 + $0x3ac] sm:$0xf]
    %v376 = vld [vmem:[#allocation5 + $0x3b0] sm:$0xf]
    %v377 = vld [vmem:[#allocation5 + $0x3b4] sm:$0xf]
    %v378 = vld [vmem:[#allocation5 + $0x3b8] sm:$0xf]
    %v379 = vld [vmem:[#allocation5 + $0x3bc] sm:$0xf]
    %v380 = vld [vmem:[#allocation5 + $0x3c0] sm:$0xf]
    %v381 = vld [vmem:[#allocation5 + $0x3c4] sm:$0xf]
    %v382 = vld [vmem:[#allocation5 + $0x3c8] sm:$0xf]
    %v383 = vld [vmem:[#allocation5 + $0x3cc] sm:$0xf]
    %v384 = vld [vmem:[#allocation5 + $0x3d0] sm:$0xf]
    %v385 = vld [vmem:[#allocation5 + $0x3d4] sm:$0xf]
    %v386 = vld [vmem:[#allocation5 + $0x3d8] sm:$0xf]
    %v387 = vld [vmem:[#allocation5 + $0x3dc] sm:$0xf]
    %v388 = vld [vmem:[#allocation5 + $0x3e0] sm:$0xf]
    %v389 = vld [vmem:[#allocation5 + $0x3e4] sm:$0xf]
    %v390 = vld [vmem:[#allocation5 + $0x3e8] sm:$0xf]
    %v391 = vld [vmem:[#allocation5 + $0x3ec] sm:$0xf]
    %v392 = vld [vmem:[#allocation5 + $0x3f0] sm:$0xf]
    %v393 = vld [vmem:[#allocation5 + $0x3f4] sm:$0xf]
    %v394 = vld [vmem:[#allocation5 + $0x3f8] sm:$0xf]
    %v395 = vld [vmem:[#allocation5 + $0x3fc] sm:$0xf]
    %v396 = vld [vmem:[#allocation5 + $0x400] sm:$0xf]
    %v397 = vld [vmem:[#allocation5 + $0x404] sm:$0xf]
    %v398 = vld [vmem:[#allocation5 + $0x408] sm:$0xf]
    %v399 = vld [vmem:[#allocation5 + $0x40c] sm:$0xf]
    %v400 = vld [vmem:[#allocation5 + $0x410] sm:$0xf]
    %v401 = vld [vmem:[#allocation5 + $0x414] sm:$0xf]
    %v402 = vld [vmem:[#allocation5 + $0x418] sm:$0xf]
    %v403 = vld [vmem:[#allocation5 + $0x41c] sm:$0xf]
    %v404 = vld [vmem:[#allocation5 + $0x420] sm:$0xf]
    %v405 = vld [vmem:[#allocation5 + $0x424] sm:$0xf]
    %v406 = vld [vmem:[#allocation5 + $0x428] sm:$0xf]
    %v407 = vld [vmem:[#allocation5 + $0x42c] sm:$0xf]
    %v408 = vld [vmem:[#allocation5 + $0x430] sm:$0xf]
    %v409 = vld [vmem:[#allocation5 + $0x434] sm:$0xf]
    %v410 = vld [vmem:[#allocation5 + $0x438] sm:$0xf]
    %v411 = vld [vmem:[#allocation5 + $0x43c] sm:$0xf]
    %v412 = vld [vmem:[#allocation5 + $0x440] sm:$0xf]
    %v413 = vld [vmem:[#allocation5 + $0x444] sm:$0xf]
    %v414 = vld [vmem:[#allocation5 + $0x448] sm:$0xf]
    %v415 = vld [vmem:[#allocation5 + $0x44c] sm:$0xf]
    %v416 = vld [vmem:[#allocation5 + $0x450] sm:$0xf]
    %v417 = vld [vmem:[#allocation5 + $0x454] sm:$0xf]
    %v418 = vld [vmem:[#allocation5 + $0x458] sm:$0xf]
    %v419 = vld [vmem:[#allocation5 + $0x45c] sm:$0xf]
    %v420 = vld [vmem:[#allocation5 + $0x460] sm:$0xf]
    %v421 = vld [vmem:[#allocation5 + $0x464] sm:$0xf]
    %v422 = vld [vmem:[#allocation5 + $0x468] sm:$0xf]
    %v423 = vld [vmem:[#allocation5 + $0x46c] sm:$0xf]
    %v424 = vld [vmem:[#allocation5 + $0x470] sm:$0xf]
    %v425 = vld [vmem:[#allocation5 + $0x474] sm:$0xf]
    %v426 = vld [vmem:[#allocation5 + $0x478] sm:$0xf]
    %v427 = vld [vmem:[#allocation5 + $0x47c] sm:$0xf]
    %v428 = vld [vmem:[#allocation5 + $0x480] sm:$0xf]
    %v429 = vld [vmem:[#allocation5 + $0x484] sm:$0xf]
    %v430 = vld [vmem:[#allocation5 + $0x488] sm:$0xf]
    %v431 = vld [vmem:[#allocation5 + $0x48c] sm:$0xf]
    %v432 = vld [vmem:[#allocation5 + $0x490] sm:$0xf]
    %v433 = vld [vmem:[#allocation5 + $0x494] sm:$0xf]
    %v434 = vld [vmem:[#allocation5 + $0x498] sm:$0xf]
    %v435 = vld [vmem:[#allocation5 + $0x49c] sm:$0xf]
    %v436 = vld [vmem:[#allocation5 + $0x4a0] sm:$0xf]
    %v437 = vld [vmem:[#allocation5 + $0x4a4] sm:$0xf]
    %v438 = vld [vmem:[#allocation5 + $0x4a8] sm:$0xf]
    %v439 = vld [vmem:[#allocation5 + $0x4ac] sm:$0xf]
    %v440 = vld [vmem:[#allocation5 + $0x4b0] sm:$0xf]
    %v441 = vld [vmem:[#allocation5 + $0x4b4] sm:$0xf]
    %v442 = vld [vmem:[#allocation5 + $0x4b8] sm:$0xf]
    %v443 = vld [vmem:[#allocation5 + $0x4bc] sm:$0xf]
    %v444 = vld [vmem:[#allocation5 + $0x4c0] sm:$0xf]
    %v445 = vld [vmem:[#allocation5 + $0x4c4] sm:$0xf]
    %v446 = vld [vmem:[#allocation5 + $0x4c8] sm:$0xf]
    %v447 = vld [vmem:[#allocation5 + $0x4cc] sm:$0xf]
    %v448 = vld [vmem:[#allocation5 + $0x4d0] sm:$0xf]
    %v449 = vld [vmem:[#allocation5 + $0x4d4] sm:$0xf]
    %v450 = vld [vmem:[#allocation5 + $0x4d8] sm:$0xf]
    %v451 = vld [vmem:[#allocation5 + $0x4dc] sm:$0xf]
    %v452 = vld [vmem:[#allocation5 + $0x4e0] sm:$0xf]
    %v453 = vld [vmem:[#allocation5 + $0x4e4] sm:$0xf]
    %v454 = vld [vmem:[#allocation5 + $0x4e8] sm:$0xf]
    %v455 = vld [vmem:[#allocation5 + $0x4ec] sm:$0xf]
    %v456 = vld [vmem:[#allocation5 + $0x4f0] sm:$0xf]
    %v457 = vld [vmem:[#allocation5 + $0x4f4] sm:$0xf]
    %v458 = vld [vmem:[#allocation5 + $0x4f8] sm:$0xf]
    %v459 = vld [vmem:[#allocation5 + $0x4fc] sm:$0xf]
    %v460 = vld [vmem:[#allocation5 + $0x500] sm:$0xf]
    %v461 = vld [vmem:[#allocation5 + $0x504] sm:$0xf]
    %v462 = vld [vmem:[#allocation5 + $0x508] sm:$0xf]
    %v463 = vld [vmem:[#allocation5 + $0x50c] sm:$0xf]
    %v464 = vld [vmem:[#allocation5 + $0x510] sm:$0xf]
    %v465 = vld [vmem:[#allocation5 + $0x514] sm:$0xf]
    %v466 = vld [vmem:[#allocation5 + $0x518] sm:$0xf]
    %v467 = vld [vmem:[#allocation5 + $0x51c] sm:$0xf]
    %v468 = vld [vmem:[#allocation5 + $0x520] sm:$0xf]
    %v469 = vld [vmem:[#allocation5 + $0x524] sm:$0xf]
    %v470 = vld [vmem:[#allocation5 + $0x528] sm:$0xf]
    %v471 = vld [vmem:[#allocation5 + $0x52c] sm:$0xf]
    %v472 = vld [vmem:[#allocation5 + $0x530] sm:$0xf]
    %v473 = vld [vmem:[#allocation5 + $0x534] sm:$0xf]
    %v474 = vld [vmem:[#allocation5 + $0x538] sm:$0xf]
    %v475 = vld [vmem:[#allocation5 + $0x53c] sm:$0xf]
    %v476 = vld [vmem:[#allocation5 + $0x540] sm:$0xf]
    %v477 = vld [vmem:[#allocation5 + $0x544] sm:$0xf]
    %v478 = vld [vmem:[#allocation5 + $0x548] sm:$0xf]
    %v479 = vld [vmem:[#allocation5 + $0x54c] sm:$0xf]
    %v480 = vld [vmem:[#allocation5 + $0x550] sm:$0xf]
    %v481 = vld [vmem:[#allocation5 + $0x554] sm:$0xf]
    %v482 = vld [vmem:[#allocation5 + $0x558] sm:$0xf]
    %v483 = vld [vmem:[#allocation5 + $0x55c] sm:$0xf]
    %v484 = vld [vmem:[#allocation5 + $0x560] sm:$0xf]
    %v485 = vld [vmem:[#allocation5 + $0x564] sm:$0xf]
    %v486 = vld [vmem:[#allocation5 + $0x568] sm:$0xf]
    %v487 = vld [vmem:[#allocation5 + $0x56c] sm:$0xf]
    %v488 = vld [vmem:[#allocation5 + $0x570] sm:$0xf]
    %v489 = vld [vmem:[#allocation5 + $0x574] sm:$0xf]
    %v490 = vld [vmem:[#allocation5 + $0x578] sm:$0xf]
    %v491 = vld [vmem:[#allocation5 + $0x57c] sm:$0xf]
    %v492 = vld [vmem:[#allocation5 + $0x580] sm:$0xf]
    %v493 = vld [vmem:[#allocation5 + $0x584] sm:$0xf]
    %v494 = vld [vmem:[#allocation5 + $0x588] sm:$0xf]
    %v495 = vld [vmem:[#allocation5 + $0x58c] sm:$0xf]
    %v496 = vld [vmem:[#allocation5 + $0x590] sm:$0xf]
    %v497 = vld [vmem:[#allocation5 + $0x594] sm:$0xf]
    %v498 = vld [vmem:[#allocation5 + $0x598] sm:$0xf]
    %v499 = vld [vmem:[#allocation5 + $0x59c] sm:$0xf]
    %v500 = vld [vmem:[#allocation5 + $0x5a0] sm:$0xf]
    %v501 = vld [vmem:[#allocation5 + $0x5a4] sm:$0xf]
    %v502 = vld [vmem:[#allocation5 + $0x5a8] sm:$0xf]
    %v503 = vld [vmem:[#allocation5 + $0x5ac] sm:$0xf]
    %v504 = vld [vmem:[#allocation5 + $0x5b0] sm:$0xf]
    %v505 = vld [vmem:[#allocation5 + $0x5b4] sm:$0xf]
    %v506 = vld [vmem:[#allocation5 + $0x5b8] sm:$0xf]
    %v507 = vld [vmem:[#allocation5 + $0x5bc] sm:$0xf]
    %v508 = vld [vmem:[#allocation5 + $0x5c0] sm:$0xf]
    %v509 = vld [vmem:[#allocation5 + $0x5c4] sm:$0xf]
    %v510 = vld [vmem:[#allocation5 + $0x5c8] sm:$0xf]
    %v511 = vld [vmem:[#allocation5 + $0x5cc] sm:$0xf]
    %v512 = vld [vmem:[#allocation5 + $0x5d0] sm:$0xf]
    %v513 = vld [vmem:[#allocation5 + $0x5d4] sm:$0xf]
    %v514 = vld [vmem:[#allocation5 + $0x5d8] sm:$0xf]
    %v515 = vld [vmem:[#allocation5 + $0x5dc] sm:$0xf]
    %v516 = vld [vmem:[#allocation5 + $0x5e0] sm:$0xf]
    %v517 = vld [vmem:[#allocation5 + $0x5e4] sm:$0xf]
    %v518 = vld [vmem:[#allocation5 + $0x5e8] sm:$0xf]
    %v519 = vld [vmem:[#allocation5 + $0x5ec] sm:$0xf]
    %v520 = vld [vmem:[#allocation5 + $0x5f0] sm:$0xf]
    %v521 = vld [vmem:[#allocation5 + $0x5f4] sm:$0xf]
    %v522 = vld [vmem:[#allocation5 + $0x5f8] sm:$0xf]
    %v523 = vld [vmem:[#allocation5 + $0x5fc] sm:$0xf]
    %v524 = vlaneseq
    %v525 = vshrl.u32 %v524, 7
    %v526 = vsub.s32 0, %v525
    %v527 = vrot.slane %v115, %v526
    %v912 = vunpack.c.l.b16 %v140
    %v913 = vunpack.c.l.b16 %v141
    %v914 = vunpack.c.l.b16 %v142
    %v915 = vunpack.c.l.b16 %v143
    %v916 = vunpack.c.l.b16 %v144
    %v917 = vunpack.c.l.b16 %v145
    %v918 = vunpack.c.l.b16 %v146
    %v919 = vunpack.c.l.b16 %v147
    %v920 = vunpack.c.l.b16 %v148
    %v921 = vunpack.c.l.b16 %v149
    %v922 = vunpack.c.l.b16 %v150
    %v923 = vunpack.c.l.b16 %v151
    %v924 = vunpack.c.l.b16 %v152
    %v925 = vunpack.c.l.b16 %v153
    %v926 = vunpack.c.l.b16 %v154
    %v927 = vunpack.c.l.b16 %v155
    %v928 = vunpack.c.l.b16 %v156
    %v929 = vunpack.c.l.b16 %v157
    %v930 = vunpack.c.l.b16 %v158
    %v931 = vunpack.c.l.b16 %v159
    %v932 = vunpack.c.l.b16 %v160
    %v933 = vunpack.c.l.b16 %v161
    %v934 = vunpack.c.l.b16 %v162
    %v935 = vunpack.c.l.b16 %v163
    %v936 = vunpack.c.l.b16 %v164
    %v937 = vunpack.c.l.b16 %v165
    %v938 = vunpack.c.l.b16 %v166
    %v939 = vunpack.c.l.b16 %v167
    %v940 = vunpack.c.l.b16 %v168
    %v941 = vunpack.c.l.b16 %v169
    %v942 = vunpack.c.l.b16 %v170
    %v943 = vunpack.c.l.b16 %v171
    %v944 = vunpack.c.l.b16 %v172
    %v945 = vunpack.c.l.b16 %v173
    %v946 = vunpack.c.l.b16 %v174
    %v947 = vunpack.c.l.b16 %v175
    %v948 = vunpack.c.l.b16 %v176
    %v949 = vunpack.c.l.b16 %v177
    %v950 = vunpack.c.l.b16 %v178
    %v951 = vunpack.c.l.b16 %v179
    %v952 = vunpack.c.l.b16 %v180
    %v953 = vunpack.c.l.b16 %v181
    %v954 = vunpack.c.l.b16 %v182
    %v955 = vunpack.c.l.b16 %v183
    %v956 = vunpack.c.l.b16 %v184
    %v957 = vunpack.c.l.b16 %v185
    %v958 = vunpack.c.l.b16 %v186
    %v959 = vunpack.c.l.b16 %v187
    %v960 = vunpack.c.l.b16 %v188
    %v961 = vunpack.c.l.b16 %v189
    %v962 = vunpack.c.l.b16 %v190
    %v963 = vunpack.c.l.b16 %v191
    %v964 = vunpack.c.l.b16 %v192
    %v965 = vunpack.c.l.b16 %v193
    %v966 = vunpack.c.l.b16 %v194
    %v967 = vunpack.c.l.b16 %v195
    %v968 = vunpack.c.l.b16 %v196
    %v969 = vunpack.c.l.b16 %v197
    %v970 = vunpack.c.l.b16 %v198
    %v971 = vunpack.c.l.b16 %v199
    %v972 = vunpack.c.l.b16 %v200
    %v973 = vunpack.c.l.b16 %v201
    %v974 = vunpack.c.l.b16 %v202
    %v975 = vunpack.c.l.b16 %v203
    %v976 = vunpack.c.l.b16 %v204
    %v977 = vunpack.c.l.b16 %v205
    %v978 = vunpack.c.l.b16 %v206
    %v979 = vunpack.c.l.b16 %v207
    %v980 = vunpack.c.l.b16 %v208
    %v981 = vunpack.c.l.b16 %v209
    %v982 = vunpack.c.l.b16 %v210
    %v983 = vunpack.c.l.b16 %v211
    %v984 = vunpack.c.l.b16 %v212
    %v985 = vunpack.c.l.b16 %v213
    %v986 = vunpack.c.l.b16 %v214
    %v987 = vunpack.c.l.b16 %v215
    %v988 = vunpack.c.l.b16 %v216
    %v989 = vunpack.c.l.b16 %v217
    %v990 = vunpack.c.l.b16 %v218
    %v991 = vunpack.c.l.b16 %v219
    %v992 = vunpack.c.l.b16 %v220
    %v993 = vunpack.c.l.b16 %v221
    %v994 = vunpack.c.l.b16 %v222
    %v995 = vunpack.c.l.b16 %v223
    %v996 = vunpack.c.l.b16 %v224
    %v997 = vunpack.c.l.b16 %v225
    %v998 = vunpack.c.l.b16 %v226
    %v999 = vunpack.c.l.b16 %v227
    %v1000 = vunpack.c.l.b16 %v228
    %v1001 = vunpack.c.l.b16 %v229
    %v1002 = vunpack.c.l.b16 %v230
    %v1003 = vunpack.c.l.b16 %v231
    %v1004 = vunpack.c.l.b16 %v232
    %v1005 = vunpack.c.l.b16 %v233
    %v1006 = vunpack.c.l.b16 %v234
    %v1007 = vunpack.c.l.b16 %v235
    %v1008 = vunpack.c.l.b16 %v236
    %v1009 = vunpack.c.l.b16 %v237
    %v1010 = vunpack.c.l.b16 %v238
    %v1011 = vunpack.c.l.b16 %v239
    %v1012 = vunpack.c.l.b16 %v240
    %v1013 = vunpack.c.l.b16 %v241
    %v1014 = vunpack.c.l.b16 %v242
    %v1015 = vunpack.c.l.b16 %v243
    %v1016 = vunpack.c.l.b16 %v244
    %v1017 = vunpack.c.l.b16 %v245
    %v1018 = vunpack.c.l.b16 %v246
    %v1019 = vunpack.c.l.b16 %v247
    %v1020 = vunpack.c.l.b16 %v248
    %v1021 = vunpack.c.l.b16 %v249
    %v1022 = vunpack.c.l.b16 %v250
    %v1023 = vunpack.c.l.b16 %v251
    %v1024 = vunpack.c.l.b16 %v252
    %v1025 = vunpack.c.l.b16 %v253
    %v1026 = vunpack.c.l.b16 %v254
    %v1027 = vunpack.c.l.b16 %v255
    %v1028 = vunpack.c.l.b16 %v256
    %v1029 = vunpack.c.l.b16 %v257
    %v1030 = vunpack.c.l.b16 %v258
    %v1031 = vunpack.c.l.b16 %v259
    %v1032 = vunpack.c.l.b16 %v260
    %v1033 = vunpack.c.l.b16 %v261
    %v1034 = vunpack.c.l.b16 %v262
    %v1035 = vunpack.c.l.b16 %v263
    %v1036 = vunpack.c.l.b16 %v264
    %v1037 = vunpack.c.l.b16 %v265
    %v1038 = vunpack.c.l.b16 %v266
    %v1039 = vunpack.c.l.b16 %v267
    %v1040 = vunpack.c.l.b16 %v268
    %v1041 = vunpack.c.l.b16 %v269
    %v1042 = vunpack.c.l.b16 %v270
    %v1043 = vunpack.c.l.b16 %v271
    %v1044 = vunpack.c.l.b16 %v272
    %v1045 = vunpack.c.l.b16 %v273
    %v1046 = vunpack.c.l.b16 %v274
    %v1047 = vunpack.c.l.b16 %v275
    %v1048 = vunpack.c.l.b16 %v276
    %v1049 = vunpack.c.l.b16 %v277
    %v1050 = vunpack.c.l.b16 %v278
    %v1051 = vunpack.c.l.b16 %v279
    %v1052 = vunpack.c.l.b16 %v280
    %v1053 = vunpack.c.l.b16 %v281
    %v1054 = vunpack.c.l.b16 %v282
    %v1055 = vunpack.c.l.b16 %v283
    %v1056 = vunpack.c.l.b16 %v284
    %v1057 = vunpack.c.l.b16 %v285
    %v1058 = vunpack.c.l.b16 %v286
    %v1059 = vunpack.c.l.b16 %v287
    %v1060 = vunpack.c.l.b16 %v288
    %v1061 = vunpack.c.l.b16 %v289
    %v1062 = vunpack.c.l.b16 %v290
    %v1063 = vunpack.c.l.b16 %v291
    %v1064 = vunpack.c.l.b16 %v292
    %v1065 = vunpack.c.l.b16 %v293
    %v1066 = vunpack.c.l.b16 %v294
    %v1067 = vunpack.c.l.b16 %v295
    %v1068 = vunpack.c.l.b16 %v296
    %v1069 = vunpack.c.l.b16 %v297
    %v1070 = vunpack.c.l.b16 %v298
    %v1071 = vunpack.c.l.b16 %v299
    %v1072 = vunpack.c.l.b16 %v300
    %v1073 = vunpack.c.l.b16 %v301
    %v1074 = vunpack.c.l.b16 %v302
    %v1075 = vunpack.c.l.b16 %v303
    %v1076 = vunpack.c.l.b16 %v304
    %v1077 = vunpack.c.l.b16 %v305
    %v1078 = vunpack.c.l.b16 %v306
    %v1079 = vunpack.c.l.b16 %v307
    %v1080 = vunpack.c.l.b16 %v308
    %v1081 = vunpack.c.l.b16 %v309
    %v1082 = vunpack.c.l.b16 %v310
    %v1083 = vunpack.c.l.b16 %v311
    %v1084 = vunpack.c.l.b16 %v312
    %v1085 = vunpack.c.l.b16 %v313
    %v1086 = vunpack.c.l.b16 %v314
    %v1087 = vunpack.c.l.b16 %v315
    %v1088 = vunpack.c.l.b16 %v316
    %v1089 = vunpack.c.l.b16 %v317
    %v1090 = vunpack.c.l.b16 %v318
    %v1091 = vunpack.c.l.b16 %v319
    %v1092 = vunpack.c.l.b16 %v320
    %v1093 = vunpack.c.l.b16 %v321
    %v1094 = vunpack.c.l.b16 %v322
    %v1095 = vunpack.c.l.b16 %v323
    %v1096 = vunpack.c.l.b16 %v324
    %v1097 = vunpack.c.l.b16 %v325
    %v1098 = vunpack.c.l.b16 %v326
    %v1099 = vunpack.c.l.b16 %v327
    %v1100 = vunpack.c.l.b16 %v328
    %v1101 = vunpack.c.l.b16 %v329
    %v1102 = vunpack.c.l.b16 %v330
    %v1103 = vunpack.c.l.b16 %v331
    %v1104 = vunpack.c.l.b16 %v332
    %v1105 = vunpack.c.l.b16 %v333
    %v1106 = vunpack.c.l.b16 %v334
    %v1107 = vunpack.c.l.b16 %v335
    %v1108 = vunpack.c.l.b16 %v336
    %v1109 = vunpack.c.l.b16 %v337
    %v1110 = vunpack.c.l.b16 %v338
    %v1111 = vunpack.c.l.b16 %v339
    %v1112 = vunpack.c.l.b16 %v340
    %v1113 = vunpack.c.l.b16 %v341
    %v1114 = vunpack.c.l.b16 %v342
    %v1115 = vunpack.c.l.b16 %v343
    %v1116 = vunpack.c.l.b16 %v344
    %v1117 = vunpack.c.l.b16 %v345
    %v1118 = vunpack.c.l.b16 %v346
    %v1119 = vunpack.c.l.b16 %v347
    %v1120 = vunpack.c.l.b16 %v348
    %v1121 = vunpack.c.l.b16 %v349
    %v1122 = vunpack.c.l.b16 %v350
    %v1123 = vunpack.c.l.b16 %v351
    %v1124 = vunpack.c.l.b16 %v352
    %v1125 = vunpack.c.l.b16 %v353
    %v1126 = vunpack.c.l.b16 %v354
    %v1127 = vunpack.c.l.b16 %v355
    %v1128 = vunpack.c.l.b16 %v356
    %v1129 = vunpack.c.l.b16 %v357
    %v1130 = vunpack.c.l.b16 %v358
    %v1131 = vunpack.c.l.b16 %v359
    %v1132 = vunpack.c.l.b16 %v360
    %v1133 = vunpack.c.l.b16 %v361
    %v1134 = vunpack.c.l.b16 %v362
    %v1135 = vunpack.c.l.b16 %v363
    %v1136 = vunpack.c.l.b16 %v364
    %v1137 = vunpack.c.l.b16 %v365
    %v1138 = vunpack.c.l.b16 %v366
    %v1139 = vunpack.c.l.b16 %v367
    %v1140 = vunpack.c.l.b16 %v368
    %v1141 = vunpack.c.l.b16 %v369
    %v1142 = vunpack.c.l.b16 %v370
    %v1143 = vunpack.c.l.b16 %v371
    %v1144 = vunpack.c.l.b16 %v372
    %v1145 = vunpack.c.l.b16 %v373
    %v1146 = vunpack.c.l.b16 %v374
    %v1147 = vunpack.c.l.b16 %v375
    %v1148 = vunpack.c.l.b16 %v376
    %v1149 = vunpack.c.l.b16 %v377
    %v1150 = vunpack.c.l.b16 %v378
    %v1151 = vunpack.c.l.b16 %v379
    %v1152 = vunpack.c.l.b16 %v380
    %v1153 = vunpack.c.l.b16 %v381
    %v1154 = vunpack.c.l.b16 %v382
    %v1155 = vunpack.c.l.b16 %v383
    %v1156 = vunpack.c.l.b16 %v384
    %v1157 = vunpack.c.l.b16 %v385
    %v1158 = vunpack.c.l.b16 %v386
    %v1159 = vunpack.c.l.b16 %v387
    %v1160 = vunpack.c.l.b16 %v388
    %v1161 = vunpack.c.l.b16 %v389
    %v1162 = vunpack.c.l.b16 %v390
    %v1163 = vunpack.c.l.b16 %v391
    %v1164 = vunpack.c.l.b16 %v392
    %v1165 = vunpack.c.l.b16 %v393
    %v1166 = vunpack.c.l.b16 %v394
    %v1167 = vunpack.c.l.b16 %v395
    %v1168 = vunpack.c.l.b16 %v396
    %v1169 = vunpack.c.l.b16 %v397
    %v1170 = vunpack.c.l.b16 %v398
    %v1171 = vunpack.c.l.b16 %v399
    %v1172 = vunpack.c.l.b16 %v400
    %v1173 = vunpack.c.l.b16 %v401
    %v1174 = vunpack.c.l.b16 %v402
    %v1175 = vunpack.c.l.b16 %v403
    %v1176 = vunpack.c.l.b16 %v404
    %v1177 = vunpack.c.l.b16 %v405
    %v1178 = vunpack.c.l.b16 %v406
    %v1179 = vunpack.c.l.b16 %v407
    %v1180 = vunpack.c.l.b16 %v408
    %v1181 = vunpack.c.l.b16 %v409
    %v1182 = vunpack.c.l.b16 %v410
    %v1183 = vunpack.c.l.b16 %v411
    %v1184 = vunpack.c.l.b16 %v412
    %v1185 = vunpack.c.l.b16 %v413
    %v1186 = vunpack.c.l.b16 %v414
    %v1187 = vunpack.c.l.b16 %v415
    %v1188 = vunpack.c.l.b16 %v416
    %v1189 = vunpack.c.l.b16 %v417
    %v1190 = vunpack.c.l.b16 %v418
    %v1191 = vunpack.c.l.b16 %v419
    %v1192 = vunpack.c.l.b16 %v420
    %v1193 = vunpack.c.l.b16 %v421
    %v1194 = vunpack.c.l.b16 %v422
    %v1195 = vunpack.c.l.b16 %v423
    %v1196 = vunpack.c.l.b16 %v424
    %v1197 = vunpack.c.l.b16 %v425
    %v1198 = vunpack.c.l.b16 %v426
    %v1199 = vunpack.c.l.b16 %v427
    %v1200 = vunpack.c.l.b16 %v428
    %v1201 = vunpack.c.l.b16 %v429
    %v1202 = vunpack.c.l.b16 %v430
    %v1203 = vunpack.c.l.b16 %v431
    %v1204 = vunpack.c.l.b16 %v432
    %v1205 = vunpack.c.l.b16 %v433
    %v1206 = vunpack.c.l.b16 %v434
    %v1207 = vunpack.c.l.b16 %v435
    %v1208 = vunpack.c.l.b16 %v436
    %v1209 = vunpack.c.l.b16 %v437
    %v1210 = vunpack.c.l.b16 %v438
    %v1211 = vunpack.c.l.b16 %v439
    %v1212 = vunpack.c.l.b16 %v440
    %v1213 = vunpack.c.l.b16 %v441
    %v1214 = vunpack.c.l.b16 %v442
    %v1215 = vunpack.c.l.b16 %v443
    %v1216 = vunpack.c.l.b16 %v444
    %v1217 = vunpack.c.l.b16 %v445
    %v1218 = vunpack.c.l.b16 %v446
    %v1219 = vunpack.c.l.b16 %v447
    %v1220 = vunpack.c.l.b16 %v448
    %v1221 = vunpack.c.l.b16 %v449
    %v1222 = vunpack.c.l.b16 %v450
    %v1223 = vunpack.c.l.b16 %v451
    %v1224 = vunpack.c.l.b16 %v452
    %v1225 = vunpack.c.l.b16 %v453
    %v1226 = vunpack.c.l.b16 %v454
    %v1227 = vunpack.c.l.b16 %v455
    %v1228 = vunpack.c.l.b16 %v456
    %v1229 = vunpack.c.l.b16 %v457
    %v1230 = vunpack.c.l.b16 %v458
    %v1231 = vunpack.c.l.b16 %v459
    %v1232 = vunpack.c.l.b16 %v460
    %v1233 = vunpack.c.l.b16 %v461
    %v1234 = vunpack.c.l.b16 %v462
    %v1235 = vunpack.c.l.b16 %v463
    %v1236 = vunpack.c.l.b16 %v464
    %v1237 = vunpack.c.l.b16 %v465
    %v1238 = vunpack.c.l.b16 %v466
    %v1239 = vunpack.c.l.b16 %v467
    %v1240 = vunpack.c.l.b16 %v468
    %v1241 = vunpack.c.l.b16 %v469
    %v1242 = vunpack.c.l.b16 %v470
    %v1243 = vunpack.c.l.b16 %v471
    %v1244 = vunpack.c.l.b16 %v472
    %v1245 = vunpack.c.l.b16 %v473
    %v1246 = vunpack.c.l.b16 %v474
    %v1247 = vunpack.c.l.b16 %v475
    %v1248 = vunpack.c.l.b16 %v476
    %v1249 = vunpack.c.l.b16 %v477
    %v1250 = vunpack.c.l.b16 %v478
    %v1251 = vunpack.c.l.b16 %v479
    %v1252 = vunpack.c.l.b16 %v480
    %v1253 = vunpack.c.l.b16 %v481
    %v1254 = vunpack.c.l.b16 %v482
    %v1255 = vunpack.c.l.b16 %v483
    %v1256 = vunpack.c.l.b16 %v484
    %v1257 = vunpack.c.l.b16 %v485
    %v1258 = vunpack.c.l.b16 %v486
    %v1259 = vunpack.c.l.b16 %v487
    %v1260 = vunpack.c.l.b16 %v488
    %v1261 = vunpack.c.l.b16 %v489
    %v1262 = vunpack.c.l.b16 %v490
    %v1263 = vunpack.c.l.b16 %v491
    %v1264 = vunpack.c.l.b16 %v492
    %v1265 = vunpack.c.l.b16 %v493
    %v1266 = vunpack.c.l.b16 %v494
    %v1267 = vunpack.c.l.b16 %v495
    %v1268 = vunpack.c.l.b16 %v496
    %v1269 = vunpack.c.l.b16 %v497
    %v1270 = vunpack.c.l.b16 %v498
    %v1271 = vunpack.c.l.b16 %v499
    %v1272 = vunpack.c.l.b16 %v500
    %v1273 = vunpack.c.l.b16 %v501
    %v1274 = vunpack.c.l.b16 %v502
    %v1275 = vunpack.c.l.b16 %v503
    %v1276 = vunpack.c.l.b16 %v504
    %v1277 = vunpack.c.l.b16 %v505
    %v1278 = vunpack.c.l.b16 %v506
    %v1279 = vunpack.c.l.b16 %v507
    %v1280 = vunpack.c.l.b16 %v508
    %v1281 = vunpack.c.l.b16 %v509
    %v1282 = vunpack.c.l.b16 %v510
    %v1283 = vunpack.c.l.b16 %v511
    %v1284 = vunpack.c.l.b16 %v512
    %v1285 = vunpack.c.l.b16 %v513
    %v1286 = vunpack.c.l.b16 %v514
    %v1287 = vunpack.c.l.b16 %v515
    %v1288 = vunpack.c.l.b16 %v516
    %v1289 = vunpack.c.l.b16 %v517
    %v1290 = vunpack.c.l.b16 %v518
    %v1291 = vunpack.c.l.b16 %v519
    %v1292 = vunpack.c.l.b16 %v520
    %v1293 = vunpack.c.l.b16 %v521
    %v1294 = vunpack.c.l.b16 %v522
    %v1295 = vunpack.c.l.b16 %v523
    %v1296 = vpack.c.b16 %v913, %v912
    %v1297 = vpack.c.b16 %v915, %v914
    %v1298 = vpack.c.b16 %v917, %v916
    %v1299 = vpack.c.b16 %v919, %v918
    %v1300 = vpack.c.b16 %v921, %v920
    %v1301 = vpack.c.b16 %v923, %v922
    %v1302 = vpack.c.b16 %v925, %v924
    %v1303 = vpack.c.b16 %v927, %v926
    %v1304 = vpack.c.b16 %v929, %v928
    %v1305 = vpack.c.b16 %v931, %v930
    %v1306 = vpack.c.b16 %v933, %v932
    %v1307 = vpack.c.b16 %v935, %v934
    %v1308 = vpack.c.b16 %v937, %v936
    %v1309 = vpack.c.b16 %v939, %v938
    %v1310 = vpack.c.b16 %v941, %v940
    %v1311 = vpack.c.b16 %v943, %v942
    %v1312 = vpack.c.b16 %v945, %v944
    %v1313 = vpack.c.b16 %v947, %v946
    %v1314 = vpack.c.b16 %v949, %v948
    %v1315 = vpack.c.b16 %v951, %v950
    %v1316 = vpack.c.b16 %v953, %v952
    %v1317 = vpack.c.b16 %v955, %v954
    %v1318 = vpack.c.b16 %v957, %v956
    %v1319 = vpack.c.b16 %v959, %v958
    %v1320 = vpack.c.b16 %v961, %v960
    %v1321 = vpack.c.b16 %v963, %v962
    %v1322 = vpack.c.b16 %v965, %v964
    %v1323 = vpack.c.b16 %v967, %v966
    %v1324 = vpack.c.b16 %v969, %v968
    %v1325 = vpack.c.b16 %v971, %v970
    %v1326 = vpack.c.b16 %v973, %v972
    %v1327 = vpack.c.b16 %v975, %v974
    %v1328 = vpack.c.b16 %v977, %v976
    %v1329 = vpack.c.b16 %v979, %v978
    %v1330 = vpack.c.b16 %v981, %v980
    %v1331 = vpack.c.b16 %v983, %v982
    %v1332 = vpack.c.b16 %v985, %v984
    %v1333 = vpack.c.b16 %v987, %v986
    %v1334 = vpack.c.b16 %v989, %v988
    %v1335 = vpack.c.b16 %v991, %v990
    %v1336 = vpack.c.b16 %v993, %v992
    %v1337 = vpack.c.b16 %v995, %v994
    %v1338 = vpack.c.b16 %v997, %v996
    %v1339 = vpack.c.b16 %v999, %v998
    %v1340 = vpack.c.b16 %v1001, %v1000
    %v1341 = vpack.c.b16 %v1003, %v1002
    %v1342 = vpack.c.b16 %v1005, %v1004
    %v1343 = vpack.c.b16 %v1007, %v1006
    %v1344 = vpack.c.b16 %v1009, %v1008
    %v1345 = vpack.c.b16 %v1011, %v1010
    %v1346 = vpack.c.b16 %v1013, %v1012
    %v1347 = vpack.c.b16 %v1015, %v1014
    %v1348 = vpack.c.b16 %v1017, %v1016
    %v1349 = vpack.c.b16 %v1019, %v1018
    %v1350 = vpack.c.b16 %v1021, %v1020
    %v1351 = vpack.c.b16 %v1023, %v1022
    %v1352 = vpack.c.b16 %v1025, %v1024
    %v1353 = vpack.c.b16 %v1027, %v1026
    %v1354 = vpack.c.b16 %v1029, %v1028
    %v1355 = vpack.c.b16 %v1031, %v1030
    %v1356 = vpack.c.b16 %v1033, %v1032
    %v1357 = vpack.c.b16 %v1035, %v1034
    %v1358 = vpack.c.b16 %v1037, %v1036
    %v1359 = vpack.c.b16 %v1039, %v1038
    %v1360 = vpack.c.b16 %v1041, %v1040
    %v1361 = vpack.c.b16 %v1043, %v1042
    %v1362 = vpack.c.b16 %v1045, %v1044
    %v1363 = vpack.c.b16 %v1047, %v1046
    %v1364 = vpack.c.b16 %v1049, %v1048
    %v1365 = vpack.c.b16 %v1051, %v1050
    %v1366 = vpack.c.b16 %v1053, %v1052
    %v1367 = vpack.c.b16 %v1055, %v1054
    %v1368 = vpack.c.b16 %v1057, %v1056
    %v1369 = vpack.c.b16 %v1059, %v1058
    %v1370 = vpack.c.b16 %v1061, %v1060
    %v1371 = vpack.c.b16 %v1063, %v1062
    %v1372 = vpack.c.b16 %v1065, %v1064
    %v1373 = vpack.c.b16 %v1067, %v1066
    %v1374 = vpack.c.b16 %v1069, %v1068
    %v1375 = vpack.c.b16 %v1071, %v1070
    %v1376 = vpack.c.b16 %v1073, %v1072
    %v1377 = vpack.c.b16 %v1075, %v1074
    %v1378 = vpack.c.b16 %v1077, %v1076
    %v1379 = vpack.c.b16 %v1079, %v1078
    %v1380 = vpack.c.b16 %v1081, %v1080
    %v1381 = vpack.c.b16 %v1083, %v1082
    %v1382 = vpack.c.b16 %v1085, %v1084
    %v1383 = vpack.c.b16 %v1087, %v1086
    %v1384 = vpack.c.b16 %v1089, %v1088
    %v1385 = vpack.c.b16 %v1091, %v1090
    %v1386 = vpack.c.b16 %v1093, %v1092
    %v1387 = vpack.c.b16 %v1095, %v1094
    %v1388 = vpack.c.b16 %v1097, %v1096
    %v1389 = vpack.c.b16 %v1099, %v1098
    %v1390 = vpack.c.b16 %v1101, %v1100
    %v1391 = vpack.c.b16 %v1103, %v1102
    %v1392 = vpack.c.b16 %v1105, %v1104
    %v1393 = vpack.c.b16 %v1107, %v1106
    %v1394 = vpack.c.b16 %v1109, %v1108
    %v1395 = vpack.c.b16 %v1111, %v1110
    %v1396 = vpack.c.b16 %v1113, %v1112
    %v1397 = vpack.c.b16 %v1115, %v1114
    %v1398 = vpack.c.b16 %v1117, %v1116
    %v1399 = vpack.c.b16 %v1119, %v1118
    %v1400 = vpack.c.b16 %v1121, %v1120
    %v1401 = vpack.c.b16 %v1123, %v1122
    %v1402 = vpack.c.b16 %v1125, %v1124
    %v1403 = vpack.c.b16 %v1127, %v1126
    %v1404 = vpack.c.b16 %v1129, %v1128
    %v1405 = vpack.c.b16 %v1131, %v1130
    %v1406 = vpack.c.b16 %v1133, %v1132
    %v1407 = vpack.c.b16 %v1135, %v1134
    %v1408 = vpack.c.b16 %v1137, %v1136
    %v1409 = vpack.c.b16 %v1139, %v1138
    %v1410 = vpack.c.b16 %v1141, %v1140
    %v1411 = vpack.c.b16 %v1143, %v1142
    %v1412 = vpack.c.b16 %v1145, %v1144
    %v1413 = vpack.c.b16 %v1147, %v1146
    %v1414 = vpack.c.b16 %v1149, %v1148
    %v1415 = vpack.c.b16 %v1151, %v1150
    %v1416 = vpack.c.b16 %v1153, %v1152
    %v1417 = vpack.c.b16 %v1155, %v1154
    %v1418 = vpack.c.b16 %v1157, %v1156
    %v1419 = vpack.c.b16 %v1159, %v1158
    %v1420 = vpack.c.b16 %v1161, %v1160
    %v1421 = vpack.c.b16 %v1163, %v1162
    %v1422 = vpack.c.b16 %v1165, %v1164
    %v1423 = vpack.c.b16 %v1167, %v1166
    %v1424 = vpack.c.b16 %v1169, %v1168
    %v1425 = vpack.c.b16 %v1171, %v1170
    %v1426 = vpack.c.b16 %v1173, %v1172
    %v1427 = vpack.c.b16 %v1175, %v1174
    %v1428 = vpack.c.b16 %v1177, %v1176
    %v1429 = vpack.c.b16 %v1179, %v1178
    %v1430 = vpack.c.b16 %v1181, %v1180
    %v1431 = vpack.c.b16 %v1183, %v1182
    %v1432 = vpack.c.b16 %v1185, %v1184
    %v1433 = vpack.c.b16 %v1187, %v1186
    %v1434 = vpack.c.b16 %v1189, %v1188
    %v1435 = vpack.c.b16 %v1191, %v1190
    %v1436 = vpack.c.b16 %v1193, %v1192
    %v1437 = vpack.c.b16 %v1195, %v1194
    %v1438 = vpack.c.b16 %v1197, %v1196
    %v1439 = vpack.c.b16 %v1199, %v1198
    %v1440 = vpack.c.b16 %v1201, %v1200
    %v1441 = vpack.c.b16 %v1203, %v1202
    %v1442 = vpack.c.b16 %v1205, %v1204
    %v1443 = vpack.c.b16 %v1207, %v1206
    %v1444 = vpack.c.b16 %v1209, %v1208
    %v1445 = vpack.c.b16 %v1211, %v1210
    %v1446 = vpack.c.b16 %v1213, %v1212
    %v1447 = vpack.c.b16 %v1215, %v1214
    %v1448 = vpack.c.b16 %v1217, %v1216
    %v1449 = vpack.c.b16 %v1219, %v1218
    %v1450 = vpack.c.b16 %v1221, %v1220
    %v1451 = vpack.c.b16 %v1223, %v1222
    %v1452 = vpack.c.b16 %v1225, %v1224
    %v1453 = vpack.c.b16 %v1227, %v1226
    %v1454 = vpack.c.b16 %v1229, %v1228
    %v1455 = vpack.c.b16 %v1231, %v1230
    %v1456 = vpack.c.b16 %v1233, %v1232
    %v1457 = vpack.c.b16 %v1235, %v1234
    %v1458 = vpack.c.b16 %v1237, %v1236
    %v1459 = vpack.c.b16 %v1239, %v1238
    %v1460 = vpack.c.b16 %v1241, %v1240
    %v1461 = vpack.c.b16 %v1243, %v1242
    %v1462 = vpack.c.b16 %v1245, %v1244
    %v1463 = vpack.c.b16 %v1247, %v1246
    %v1464 = vpack.c.b16 %v1249, %v1248
    %v1465 = vpack.c.b16 %v1251, %v1250
    %v1466 = vpack.c.b16 %v1253, %v1252
    %v1467 = vpack.c.b16 %v1255, %v1254
    %v1468 = vpack.c.b16 %v1257, %v1256
    %v1469 = vpack.c.b16 %v1259, %v1258
    %v1470 = vpack.c.b16 %v1261, %v1260
    %v1471 = vpack.c.b16 %v1263, %v1262
    %v1472 = vpack.c.b16 %v1265, %v1264
    %v1473 = vpack.c.b16 %v1267, %v1266
    %v1474 = vpack.c.b16 %v1269, %v1268
    %v1475 = vpack.c.b16 %v1271, %v1270
    %v1476 = vpack.c.b16 %v1273, %v1272
    %v1477 = vpack.c.b16 %v1275, %v1274
    %v1478 = vpack.c.b16 %v1277, %v1276
    %v1479 = vpack.c.b16 %v1279, %v1278
    %v1480 = vpack.c.b16 %v1281, %v1280
    %v1481 = vpack.c.b16 %v1283, %v1282
    %v1482 = vpack.c.b16 %v1285, %v1284
    %v1483 = vpack.c.b16 %v1287, %v1286
    %v1484 = vpack.c.b16 %v1289, %v1288
    %v1485 = vpack.c.b16 %v1291, %v1290
    %v1486 = vpack.c.b16 %v1293, %v1292
    %v1487 = vpack.c.b16 %v1295, %v1294
    %1680 = vmatprep.subr.bf16.mxu0 0
    %1681 = vmatpush1.bf16.msra.mxu0 %v1296
    %1682 = vmatprep.subr.bf16.mxu0 0
    %1683 = vmatpush1.bf16.msra.mxu0 %v1297
    %1684 = vmatprep.subr.bf16.mxu0 0
    %1685 = vmatpush1.bf16.msra.mxu0 %v1298
    %1686 = vmatprep.subr.bf16.mxu0 0
    %1687 = vmatpush1.bf16.msra.mxu0 %v1299
    %1688 = vmatprep.subr.bf16.mxu0 0
    %1689 = vmatpush1.bf16.msra.mxu0 %v1300
    %1690 = vmatprep.subr.bf16.mxu0 0
    %1691 = vmatpush1.bf16.msra.mxu0 %v1301
    %1692 = vmatprep.subr.bf16.mxu0 0
    %1693 = vmatpush1.bf16.msra.mxu0 %v1302
    %1694 = vmatprep.subr.bf16.mxu0 0
    %1695 = vmatpush1.bf16.msra.mxu0 %v1303
    %1696 = vmatprep.subr.bf16.mxu0 0
    %1697 = vmatpush1.bf16.msra.mxu0 %v1304
    %1698 = vmatprep.subr.bf16.mxu0 0
    %1699 = vmatpush1.bf16.msra.mxu0 %v1305
    %1700 = vmatprep.subr.bf16.mxu0 0
    %1701 = vmatpush1.bf16.msra.mxu0 %v1306
    %1702 = vmatprep.subr.bf16.mxu0 0
    %1703 = vmatpush1.bf16.msra.mxu0 %v1307
    %1704 = vmatprep.subr.bf16.mxu0 0
    %1705 = vmatpush1.bf16.msra.mxu0 %v1308
    %1706 = vmatprep.subr.bf16.mxu0 0
    %1707 = vmatpush1.bf16.msra.mxu0 %v1309
    %1708 = vmatprep.subr.bf16.mxu0 0
    %1709 = vmatpush1.bf16.msra.mxu0 %v1310
    %1710 = vmatprep.subr.bf16.mxu0 0
    %1711 = vmatpush1.bf16.msra.mxu0 %v1311
    %1712 = vmatprep.mubr.bf16.mxu0 %v117
    %1713 = vmatmul.mubr.bf16.gmra.mrb[0].mxu0 %v116
    %v1714 = vpop.f32.mrb[0].mxu0
    %v1715 = vadd.f32 %v527, %v1714
    %v1716 = vpop.f32.mrb[0].mxu0
    %v1717 = vpop.f32.mrb[0].mxu0
    %v1718 = vpop.f32.mrb[0].mxu0
    %1719 = vdwg.mxu0
    %1720 = vmatprep.subr.bf16.mxu0 0
    %1721 = vmatpush1.bf16.msra.mxu0 %v1312
    %1722 = vmatprep.subr.bf16.mxu0 0
    %1723 = vmatpush1.bf16.msra.mxu0 %v1313
    %1724 = vmatprep.subr.bf16.mxu0 0
    %1725 = vmatpush1.bf16.msra.mxu0 %v1314
    %1726 = vmatprep.subr.bf16.mxu0 0
    %1727 = vmatpush1.bf16.msra.mxu0 %v1315
    %1728 = vmatprep.subr.bf16.mxu0 0
    %1729 = vmatpush1.bf16.msra.mxu0 %v1316
    %1730 = vmatprep.subr.bf16.mxu0 0
    %1731 = vmatpush1.bf16.msra.mxu0 %v1317
    %1732 = vmatprep.subr.bf16.mxu0 0
    %1733 = vmatpush1.bf16.msra.mxu0 %v1318
    %1734 = vmatprep.subr.bf16.mxu0 0
    %1735 = vmatpush1.bf16.msra.mxu0 %v1319
    %1736 = vmatprep.subr.bf16.mxu0 0
    %1737 = vmatpush1.bf16.msra.mxu0 %v1320
    %1738 = vmatprep.subr.bf16.mxu0 0
    %1739 = vmatpush1.bf16.msra.mxu0 %v1321
    %1740 = vmatprep.subr.bf16.mxu0 0
    %1741 = vmatpush1.bf16.msra.mxu0 %v1322
    %1742 = vmatprep.subr.bf16.mxu0 0
    %1743 = vmatpush1.bf16.msra.mxu0 %v1323
    %1744 = vmatprep.subr.bf16.mxu0 0
    %1745 = vmatpush1.bf16.msra.mxu0 %v1324
    %1746 = vmatprep.subr.bf16.mxu0 0
    %1747 = vmatpush1.bf16.msra.mxu0 %v1325
    %1748 = vmatprep.subr.bf16.mxu0 0
    %1749 = vmatpush1.bf16.msra.mxu0 %v1326
    %1750 = vmatprep.subr.bf16.mxu0 0
    %1751 = vmatpush1.bf16.msra.mxu0 %v1327
    %1752 = vmatprep.mubr.bf16.mxu0 %v119
    %1753 = vmatmul.mubr.bf16.gmra.mrb[0].mxu0 %v118
    %v1754 = vpop.f32.mrb[0].mxu0
    %v1755 = vadd.f32 %v1715, %v1754
    %v1756 = vpop.f32.mrb[0].mxu0
    %v1757 = vpop.f32.mrb[0].mxu0
    %v1758 = vpop.f32.mrb[0].mxu0
    %1759 = vdwg.mxu0
    %1760 = vmatprep.subr.bf16.mxu0 0
    %1761 = vmatpush1.bf16.msra.mxu0 %v1328
    %1762 = vmatprep.subr.bf16.mxu0 0
    %1763 = vmatpush1.bf16.msra.mxu0 %v1329
    %1764 = vmatprep.subr.bf16.mxu0 0
    %1765 = vmatpush1.bf16.msra.mxu0 %v1330
    %1766 = vmatprep.subr.bf16.mxu0 0
    %1767 = vmatpush1.bf16.msra.mxu0 %v1331
    %1768 = vmatprep.subr.bf16.mxu0 0
    %1769 = vmatpush1.bf16.msra.mxu0 %v1332
    %1770 = vmatprep.subr.bf16.mxu0 0
    %1771 = vmatpush1.bf16.msra.mxu0 %v1333
    %1772 = vmatprep.subr.bf16.mxu0 0
    %1773 = vmatpush1.bf16.msra.mxu0 %v1334
    %1774 = vmatprep.subr.bf16.mxu0 0
    %1775 = vmatpush1.bf16.msra.mxu0 %v1335
    %1776 = vmatprep.subr.bf16.mxu0 0
    %1777 = vmatpush1.bf16.msra.mxu0 %v1336
    %1778 = vmatprep.subr.bf16.mxu0 0
    %1779 = vmatpush1.bf16.msra.mxu0 %v1337
    %1780 = vmatprep.subr.bf16.mxu0 0
    %1781 = vmatpush1.bf16.msra.mxu0 %v1338
    %1782 = vmatprep.subr.bf16.mxu0 0
    %1783 = vmatpush1.bf16.msra.mxu0 %v1339
    %1784 = vmatprep.subr.bf16.mxu0 0
    %1785 = vmatpush1.bf16.msra.mxu0 %v1340
    %1786 = vmatprep.subr.bf16.mxu0 0
    %1787 = vmatpush1.bf16.msra.mxu0 %v1341
    %1788 = vmatprep.subr.bf16.mxu0 0
    %1789 = vmatpush1.bf16.msra.mxu0 %v1342
    %1790 = vmatprep.subr.bf16.mxu0 0
    %1791 = vmatpush1.bf16.msra.mxu0 %v1343
    %1792 = vmatprep.mubr.bf16.mxu0 %v121
    %1793 = vmatmul.mubr.bf16.gmra.mrb[0].mxu0 %v120
    %v1794 = vpop.f32.mrb[0].mxu0
    %v1795 = vadd.f32 %v1755, %v1794
    %v1796 = vpop.f32.mrb[0].mxu0
    %v1797 = vpop.f32.mrb[0].mxu0
    %v1798 = vpop.f32.mrb[0].mxu0
    %1799 = vdwg.mxu0
    %1800 = vmatprep.subr.bf16.mxu0 0
    %1801 = vmatpush1.bf16.msra.mxu0 %v1344
    %1802 = vmatprep.subr.bf16.mxu0 0
    %1803 = vmatpush1.bf16.msra.mxu0 %v1345
    %1804 = vmatprep.subr.bf16.mxu0 0
    %1805 = vmatpush1.bf16.msra.mxu0 %v1346
    %1806 = vmatprep.subr.bf16.mxu0 0
    %1807 = vmatpush1.bf16.msra.mxu0 %v1347
    %1808 = vmatprep.subr.bf16.mxu0 0
    %1809 = vmatpush1.bf16.msra.mxu0 %v1348
    %1810 = vmatprep.subr.bf16.mxu0 0
    %1811 = vmatpush1.bf16.msra.mxu0 %v1349
    %1812 = vmatprep.subr.bf16.mxu0 0
    %1813 = vmatpush1.bf16.msra.mxu0 %v1350
    %1814 = vmatprep.subr.bf16.mxu0 0
    %1815 = vmatpush1.bf16.msra.mxu0 %v1351
    %1816 = vmatprep.subr.bf16.mxu0 0
    %1817 = vmatpush1.bf16.msra.mxu0 %v1352
    %1818 = vmatprep.subr.bf16.mxu0 0
    %1819 = vmatpush1.bf16.msra.mxu0 %v1353
    %1820 = vmatprep.subr.bf16.mxu0 0
    %1821 = vmatpush1.bf16.msra.mxu0 %v1354
    %1822 = vmatprep.subr.bf16.mxu0 0
    %1823 = vmatpush1.bf16.msra.mxu0 %v1355
    %1824 = vmatprep.subr.bf16.mxu0 0
    %1825 = vmatpush1.bf16.msra.mxu0 %v1356
    %1826 = vmatprep.subr.bf16.mxu0 0
    %1827 = vmatpush1.bf16.msra.mxu0 %v1357
    %1828 = vmatprep.subr.bf16.mxu0 0
    %1829 = vmatpush1.bf16.msra.mxu0 %v1358
    %1830 = vmatprep.subr.bf16.mxu0 0
    %1831 = vmatpush1.bf16.msra.mxu0 %v1359
    %1832 = vmatprep.mubr.bf16.mxu0 %v123
    %1833 = vmatmul.mubr.bf16.gmra.mrb[0].mxu0 %v122
    %v1834 = vpop.f32.mrb[0].mxu0
    %v1835 = vadd.f32 %v1795, %v1834
    %v1836 = vpop.f32.mrb[0].mxu0
    %v1837 = vpop.f32.mrb[0].mxu0
    %v1838 = vpop.f32.mrb[0].mxu0
    %1839 = vdwg.mxu0
    %1840 = vmatprep.subr.bf16.mxu0 0
    %1841 = vmatpush1.bf16.msra.mxu0 %v1360
    %1842 = vmatprep.subr.bf16.mxu0 0
    %1843 = vmatpush1.bf16.msra.mxu0 %v1361
    %1844 = vmatprep.subr.bf16.mxu0 0
    %1845 = vmatpush1.bf16.msra.mxu0 %v1362
    %1846 = vmatprep.subr.bf16.mxu0 0
    %1847 = vmatpush1.bf16.msra.mxu0 %v1363
    %1848 = vmatprep.subr.bf16.mxu0 0
    %1849 = vmatpush1.bf16.msra.mxu0 %v1364
    %1850 = vmatprep.subr.bf16.mxu0 0
    %1851 = vmatpush1.bf16.msra.mxu0 %v1365
    %1852 = vmatprep.subr.bf16.mxu0 0
    %1853 = vmatpush1.bf16.msra.mxu0 %v1366
    %1854 = vmatprep.subr.bf16.mxu0 0
    %1855 = vmatpush1.bf16.msra.mxu0 %v1367
    %1856 = vmatprep.subr.bf16.mxu0 0
    %1857 = vmatpush1.bf16.msra.mxu0 %v1368
    %1858 = vmatprep.subr.bf16.mxu0 0
    %1859 = vmatpush1.bf16.msra.mxu0 %v1369
    %1860 = vmatprep.subr.bf16.mxu0 0
    %1861 = vmatpush1.bf16.msra.mxu0 %v1370
    %1862 = vmatprep.subr.bf16.mxu0 0
    %1863 = vmatpush1.bf16.msra.mxu0 %v1371
    %1864 = vmatprep.subr.bf16.mxu0 0
    %1865 = vmatpush1.bf16.msra.mxu0 %v1372
    %1866 = vmatprep.subr.bf16.mxu0 0
    %1867 = vmatpush1.bf16.msra.mxu0 %v1373
    %1868 = vmatprep.subr.bf16.mxu0 0
    %1869 = vmatpush1.bf16.msra.mxu0 %v1374
    %1870 = vmatprep.subr.bf16.mxu0 0
    %1871 = vmatpush1.bf16.msra.mxu0 %v1375
    %1872 = vmatprep.mubr.bf16.mxu0 %v125
    %1873 = vmatmul.mubr.bf16.gmra.mrb[0].mxu0 %v124
    %v1874 = vpop.f32.mrb[0].mxu0
    %v1875 = vadd.f32 %v1835, %v1874
    %v1876 = vpop.f32.mrb[0].mxu0
    %v1877 = vpop.f32.mrb[0].mxu0
    %v1878 = vpop.f32.mrb[0].mxu0
    %1879 = vdwg.mxu0
    %1880 = vmatprep.subr.bf16.mxu0 0
    %1881 = vmatpush1.bf16.msra.mxu0 %v1376
    %1882 = vmatprep.subr.bf16.mxu0 0
    %1883 = vmatpush1.bf16.msra.mxu0 %v1377
    %1884 = vmatprep.subr.bf16.mxu0 0
    %1885 = vmatpush1.bf16.msra.mxu0 %v1378
    %1886 = vmatprep.subr.bf16.mxu0 0
    %1887 = vmatpush1.bf16.msra.mxu0 %v1379
    %1888 = vmatprep.subr.bf16.mxu0 0
    %1889 = vmatpush1.bf16.msra.mxu0 %v1380
    %1890 = vmatprep.subr.bf16.mxu0 0
    %1891 = vmatpush1.bf16.msra.mxu0 %v1381
    %1892 = vmatprep.subr.bf16.mxu0 0
    %1893 = vmatpush1.bf16.msra.mxu0 %v1382
    %1894 = vmatprep.subr.bf16.mxu0 0
    %1895 = vmatpush1.bf16.msra.mxu0 %v1383
    %1896 = vmatprep.subr.bf16.mxu0 0
    %1897 = vmatpush1.bf16.msra.mxu0 %v1384
    %1898 = vmatprep.subr.bf16.mxu0 0
    %1899 = vmatpush1.bf16.msra.mxu0 %v1385
    %1900 = vmatprep.subr.bf16.mxu0 0
    %1901 = vmatpush1.bf16.msra.mxu0 %v1386
    %1902 = vmatprep.subr.bf16.mxu0 0
    %1903 = vmatpush1.bf16.msra.mxu0 %v1387
    %1904 = vmatprep.subr.bf16.mxu0 0
    %1905 = vmatpush1.bf16.msra.mxu0 %v1388
    %1906 = vmatprep.subr.bf16.mxu0 0
    %1907 = vmatpush1.bf16.msra.mxu0 %v1389
    %1908 = vmatprep.subr.bf16.mxu0 0
    %1909 = vmatpush1.bf16.msra.mxu0 %v1390
    %1910 = vmatprep.subr.bf16.mxu0 0
    %1911 = vmatpush1.bf16.msra.mxu0 %v1391
    %1912 = vmatprep.mubr.bf16.mxu0 %v127
    %1913 = vmatmul.mubr.bf16.gmra.mrb[0].mxu0 %v126
    %v1914 = vpop.f32.mrb[0].mxu0
    %v1915 = vadd.f32 %v1875, %v1914
    %v1916 = vpop.f32.mrb[0].mxu0
    %v1917 = vpop.f32.mrb[0].mxu0
    %v1918 = vpop.f32.mrb[0].mxu0
    %1919 = vdwg.mxu0
    %1920 = vmatprep.subr.bf16.mxu0 0
    %1921 = vmatpush1.bf16.msra.mxu0 %v1392
    %1922 = vmatprep.subr.bf16.mxu0 0
    %1923 = vmatpush1.bf16.msra.mxu0 %v1393
    %1924 = vmatprep.subr.bf16.mxu0 0
    %1925 = vmatpush1.bf16.msra.mxu0 %v1394
    %1926 = vmatprep.subr.bf16.mxu0 0
    %1927 = vmatpush1.bf16.msra.mxu0 %v1395
    %1928 = vmatprep.subr.bf16.mxu0 0
    %1929 = vmatpush1.bf16.msra.mxu0 %v1396
    %1930 = vmatprep.subr.bf16.mxu0 0
    %1931 = vmatpush1.bf16.msra.mxu0 %v1397
    %1932 = vmatprep.subr.bf16.mxu0 0
    %1933 = vmatpush1.bf16.msra.mxu0 %v1398
    %1934 = vmatprep.subr.bf16.mxu0 0
    %1935 = vmatpush1.bf16.msra.mxu0 %v1399
    %1936 = vmatprep.subr.bf16.mxu0 0
    %1937 = vmatpush1.bf16.msra.mxu0 %v1400
    %1938 = vmatprep.subr.bf16.mxu0 0
    %1939 = vmatpush1.bf16.msra.mxu0 %v1401
    %1940 = vmatprep.subr.bf16.mxu0 0
    %1941 = vmatpush1.bf16.msra.mxu0 %v1402
    %1942 = vmatprep.subr.bf16.mxu0 0
    %1943 = vmatpush1.bf16.msra.mxu0 %v1403
    %1944 = vmatprep.subr.bf16.mxu0 0
    %1945 = vmatpush1.bf16.msra.mxu0 %v1404
    %1946 = vmatprep.subr.bf16.mxu0 0
    %1947 = vmatpush1.bf16.msra.mxu0 %v1405
    %1948 = vmatprep.subr.bf16.mxu0 0
    %1949 = vmatpush1.bf16.msra.mxu0 %v1406
    %1950 = vmatprep.subr.bf16.mxu0 0
    %1951 = vmatpush1.bf16.msra.mxu0 %v1407
    %1952 = vmatprep.mubr.bf16.mxu0 %v129
    %1953 = vmatmul.mubr.bf16.gmra.mrb[0].mxu0 %v128
    %v1954 = vpop.f32.mrb[0].mxu0
    %v1955 = vadd.f32 %v1915, %v1954
    %v1956 = vpop.f32.mrb[0].mxu0
    %v1957 = vpop.f32.mrb[0].mxu0
    %v1958 = vpop.f32.mrb[0].mxu0
    %1959 = vdwg.mxu0
    %1960 = vmatprep.subr.bf16.mxu0 0
    %1961 = vmatpush1.bf16.msra.mxu0 %v1408
    %1962 = vmatprep.subr.bf16.mxu0 0
    %1963 = vmatpush1.bf16.msra.mxu0 %v1409
    %1964 = vmatprep.subr.bf16.mxu0 0
    %1965 = vmatpush1.bf16.msra.mxu0 %v1410
    %1966 = vmatprep.subr.bf16.mxu0 0
    %1967 = vmatpush1.bf16.msra.mxu0 %v1411
    %1968 = vmatprep.subr.bf16.mxu0 0
    %1969 = vmatpush1.bf16.msra.mxu0 %v1412
    %1970 = vmatprep.subr.bf16.mxu0 0
    %1971 = vmatpush1.bf16.msra.mxu0 %v1413
    %1972 = vmatprep.subr.bf16.mxu0 0
    %1973 = vmatpush1.bf16.msra.mxu0 %v1414
    %1974 = vmatprep.subr.bf16.mxu0 0
    %1975 = vmatpush1.bf16.msra.mxu0 %v1415
    %1976 = vmatprep.subr.bf16.mxu0 0
    %1977 = vmatpush1.bf16.msra.mxu0 %v1416
    %1978 = vmatprep.subr.bf16.mxu0 0
    %1979 = vmatpush1.bf16.msra.mxu0 %v1417
    %1980 = vmatprep.subr.bf16.mxu0 0
    %1981 = vmatpush1.bf16.msra.mxu0 %v1418
    %1982 = vmatprep.subr.bf16.mxu0 0
    %1983 = vmatpush1.bf16.msra.mxu0 %v1419
    %1984 = vmatprep.subr.bf16.mxu0 0
    %1985 = vmatpush1.bf16.msra.mxu0 %v1420
    %1986 = vmatprep.subr.bf16.mxu0 0
    %1987 = vmatpush1.bf16.msra.mxu0 %v1421
    %1988 = vmatprep.subr.bf16.mxu0 0
    %1989 = vmatpush1.bf16.msra.mxu0 %v1422
    %1990 = vmatprep.subr.bf16.mxu0 0
    %1991 = vmatpush1.bf16.msra.mxu0 %v1423
    %1992 = vmatprep.mubr.bf16.mxu0 %v131
    %1993 = vmatmul.mubr.bf16.gmra.mrb[0].mxu0 %v130
    %v1994 = vpop.f32.mrb[0].mxu0
    %v1995 = vadd.f32 %v1955, %v1994
    %v1996 = vpop.f32.mrb[0].mxu0
    %v1997 = vpop.f32.mrb[0].mxu0
    %v1998 = vpop.f32.mrb[0].mxu0
    %1999 = vdwg.mxu0
    %2000 = vmatprep.subr.bf16.mxu0 0
    %2001 = vmatpush1.bf16.msra.mxu0 %v1424
    %2002 = vmatprep.subr.bf16.mxu0 0
    %2003 = vmatpush1.bf16.msra.mxu0 %v1425
    %2004 = vmatprep.subr.bf16.mxu0 0
    %2005 = vmatpush1.bf16.msra.mxu0 %v1426
    %2006 = vmatprep.subr.bf16.mxu0 0
    %2007 = vmatpush1.bf16.msra.mxu0 %v1427
    %2008 = vmatprep.subr.bf16.mxu0 0
    %2009 = vmatpush1.bf16.msra.mxu0 %v1428
    %2010 = vmatprep.subr.bf16.mxu0 0
    %2011 = vmatpush1.bf16.msra.mxu0 %v1429
    %2012 = vmatprep.subr.bf16.mxu0 0
    %2013 = vmatpush1.bf16.msra.mxu0 %v1430
    %2014 = vmatprep.subr.bf16.mxu0 0
    %2015 = vmatpush1.bf16.msra.mxu0 %v1431
    %2016 = vmatprep.subr.bf16.mxu0 0
    %2017 = vmatpush1.bf16.msra.mxu0 %v1432
    %2018 = vmatprep.subr.bf16.mxu0 0
    %2019 = vmatpush1.bf16.msra.mxu0 %v1433
    %2020 = vmatprep.subr.bf16.mxu0 0
    %2021 = vmatpush1.bf16.msra.mxu0 %v1434
    %2022 = vmatprep.subr.bf16.mxu0 0
    %2023 = vmatpush1.bf16.msra.mxu0 %v1435
    %2024 = vmatprep.subr.bf16.mxu0 0
    %2025 = vmatpush1.bf16.msra.mxu0 %v1436
    %2026 = vmatprep.subr.bf16.mxu0 0
    %2027 = vmatpush1.bf16.msra.mxu0 %v1437
    %2028 = vmatprep.subr.bf16.mxu0 0
    %2029 = vmatpush1.bf16.msra.mxu0 %v1438
    %2030 = vmatprep.subr.bf16.mxu0 0
    %2031 = vmatpush1.bf16.msra.mxu0 %v1439
    %2032 = vmatprep.mubr.bf16.mxu0 %v133
    %2033 = vmatmul.mubr.bf16.gmra.mrb[0].mxu0 %v132
    %v2034 = vpop.f32.mrb[0].mxu0
    %v2035 = vadd.f32 %v1995, %v2034
    %v2036 = vpop.f32.mrb[0].mxu0
    %v2037 = vpop.f32.mrb[0].mxu0
    %v2038 = vpop.f32.mrb[0].mxu0
    %2039 = vdwg.mxu0
    %2040 = vmatprep.subr.bf16.mxu0 0
    %2041 = vmatpush1.bf16.msra.mxu0 %v1440
    %2042 = vmatprep.subr.bf16.mxu0 0
    %2043 = vmatpush1.bf16.msra.mxu0 %v1441
    %2044 = vmatprep.subr.bf16.mxu0 0
    %2045 = vmatpush1.bf16.msra.mxu0 %v1442
    %2046 = vmatprep.subr.bf16.mxu0 0
    %2047 = vmatpush1.bf16.msra.mxu0 %v1443
    %2048 = vmatprep.subr.bf16.mxu0 0
    %2049 = vmatpush1.bf16.msra.mxu0 %v1444
    %2050 = vmatprep.subr.bf16.mxu0 0
    %2051 = vmatpush1.bf16.msra.mxu0 %v1445
    %2052 = vmatprep.subr.bf16.mxu0 0
    %2053 = vmatpush1.bf16.msra.mxu0 %v1446
    %2054 = vmatprep.subr.bf16.mxu0 0
    %2055 = vmatpush1.bf16.msra.mxu0 %v1447
    %2056 = vmatprep.subr.bf16.mxu0 0
    %2057 = vmatpush1.bf16.msra.mxu0 %v1448
    %2058 = vmatprep.subr.bf16.mxu0 0
    %2059 = vmatpush1.bf16.msra.mxu0 %v1449
    %2060 = vmatprep.subr.bf16.mxu0 0
    %2061 = vmatpush1.bf16.msra.mxu0 %v1450
    %2062 = vmatprep.subr.bf16.mxu0 0
    %2063 = vmatpush1.bf16.msra.mxu0 %v1451
    %2064 = vmatprep.subr.bf16.mxu0 0
    %2065 = vmatpush1.bf16.msra.mxu0 %v1452
    %2066 = vmatprep.subr.bf16.mxu0 0
    %2067 = vmatpush1.bf16.msra.mxu0 %v1453
    %2068 = vmatprep.subr.bf16.mxu0 0
    %2069 = vmatpush1.bf16.msra.mxu0 %v1454
    %2070 = vmatprep.subr.bf16.mxu0 0
    %2071 = vmatpush1.bf16.msra.mxu0 %v1455
    %2072 = vmatprep.mubr.bf16.mxu0 %v135
    %2073 = vmatmul.mubr.bf16.gmra.mrb[0].mxu0 %v134
    %v2074 = vpop.f32.mrb[0].mxu0
    %v2075 = vadd.f32 %v2035, %v2074
    %v2076 = vpop.f32.mrb[0].mxu0
    %v2077 = vpop.f32.mrb[0].mxu0
    %v2078 = vpop.f32.mrb[0].mxu0
    %2079 = vdwg.mxu0
    %2080 = vmatprep.subr.bf16.mxu0 0
    %2081 = vmatpush1.bf16.msra.mxu0 %v1456
    %2082 = vmatprep.subr.bf16.mxu0 0
    %2083 = vmatpush1.bf16.msra.mxu0 %v1457
    %2084 = vmatprep.subr.bf16.mxu0 0
    %2085 = vmatpush1.bf16.msra.mxu0 %v1458
    %2086 = vmatprep.subr.bf16.mxu0 0
    %2087 = vmatpush1.bf16.msra.mxu0 %v1459
    %2088 = vmatprep.subr.bf16.mxu0 0
    %2089 = vmatpush1.bf16.msra.mxu0 %v1460
    %2090 = vmatprep.subr.bf16.mxu0 0
    %2091 = vmatpush1.bf16.msra.mxu0 %v1461
    %2092 = vmatprep.subr.bf16.mxu0 0
    %2093 = vmatpush1.bf16.msra.mxu0 %v1462
    %2094 = vmatprep.subr.bf16.mxu0 0
    %2095 = vmatpush1.bf16.msra.mxu0 %v1463
    %2096 = vmatprep.subr.bf16.mxu0 0
    %2097 = vmatpush1.bf16.msra.mxu0 %v1464
    %2098 = vmatprep.subr.bf16.mxu0 0
    %2099 = vmatpush1.bf16.msra.mxu0 %v1465
    %2100 = vmatprep.subr.bf16.mxu0 0
    %2101 = vmatpush1.bf16.msra.mxu0 %v1466
    %2102 = vmatprep.subr.bf16.mxu0 0
    %2103 = vmatpush1.bf16.msra.mxu0 %v1467
    %2104 = vmatprep.subr.bf16.mxu0 0
    %2105 = vmatpush1.bf16.msra.mxu0 %v1468
    %2106 = vmatprep.subr.bf16.mxu0 0
    %2107 = vmatpush1.bf16.msra.mxu0 %v1469
    %2108 = vmatprep.subr.bf16.mxu0 0
    %2109 = vmatpush1.bf16.msra.mxu0 %v1470
    %2110 = vmatprep.subr.bf16.mxu0 0
    %2111 = vmatpush1.bf16.msra.mxu0 %v1471
    %2112 = vmatprep.mubr.bf16.mxu0 %v137
    %2113 = vmatmul.mubr.bf16.gmra.mrb[0].mxu0 %v136
    %v2114 = vpop.f32.mrb[0].mxu0
    %v2115 = vadd.f32 %v2075, %v2114
    %v2116 = vpop.f32.mrb[0].mxu0
    %v2117 = vpop.f32.mrb[0].mxu0
    %v2118 = vpop.f32.mrb[0].mxu0
    %2119 = vdwg.mxu0
    %2120 = vmatprep.subr.bf16.mxu0 0
    %2121 = vmatpush1.bf16.msra.mxu0 %v1472
    %2122 = vmatprep.subr.bf16.mxu0 0
    %2123 = vmatpush1.bf16.msra.mxu0 %v1473
    %2124 = vmatprep.subr.bf16.mxu0 0
    %2125 = vmatpush1.bf16.msra.mxu0 %v1474
    %2126 = vmatprep.subr.bf16.mxu0 0
    %2127 = vmatpush1.bf16.msra.mxu0 %v1475
    %2128 = vmatprep.subr.bf16.mxu0 0
    %2129 = vmatpush1.bf16.msra.mxu0 %v1476
    %2130 = vmatprep.subr.bf16.mxu0 0
    %2131 = vmatpush1.bf16.msra.mxu0 %v1477
    %2132 = vmatprep.subr.bf16.mxu0 0
    %2133 = vmatpush1.bf16.msra.mxu0 %v1478
    %2134 = vmatprep.subr.bf16.mxu0 0
    %2135 = vmatpush1.bf16.msra.mxu0 %v1479
    %2136 = vmatprep.subr.bf16.mxu0 0
    %2137 = vmatpush1.bf16.msra.mxu0 %v1480
    %2138 = vmatprep.subr.bf16.mxu0 0
    %2139 = vmatpush1.bf16.msra.mxu0 %v1481
    %2140 = vmatprep.subr.bf16.mxu0 0
    %2141 = vmatpush1.bf16.msra.mxu0 %v1482
    %2142 = vmatprep.subr.bf16.mxu0 0
    %2143 = vmatpush1.bf16.msra.mxu0 %v1483
    %2144 = vmatprep.subr.bf16.mxu0 0
    %2145 = vmatpush1.bf16.msra.mxu0 %v1484
    %2146 = vmatprep.subr.bf16.mxu0 0
    %2147 = vmatpush1.bf16.msra.mxu0 %v1485
    %2148 = vmatprep.subr.bf16.mxu0 0
    %2149 = vmatpush1.bf16.msra.mxu0 %v1486
    %2150 = vmatprep.subr.bf16.mxu0 0
    %2151 = vmatpush1.bf16.msra.mxu0 %v1487
    %2152 = vmatprep.mubr.bf16.mxu0 %v139
    %2153 = vmatmul.mubr.bf16.gmra.mrb[0].mxu0 %v138
    %v2154 = vpop.f32.mrb[0].mxu0
    %v2155 = vadd.f32 %v2115, %v2154
    %v2156 = vpop.f32.mrb[0].mxu0
    %v2157 = vpop.f32.mrb[0].mxu0
    %v2158 = vpop.f32.mrb[0].mxu0
    %2159 = vdwg.mxu0
    %v2160 = vmax.f32 %v2155, 0.0
    %v2161 = vld [vmem:[%s5 + $0x1] sm:$0x1]
    %v2162 = vpack.c.bf16 %v2160, %v2160
    %v2163 = vld [vmem:[#allocation7] sm:$0xf]
    %v2164 = vld [vmem:[#allocation7 + $0x4] sm:$0xf]
    %v2165 = vld [vmem:[#allocation7 + $0x8] sm:$0xf]
    %v2166 = vld [vmem:[#allocation7 + $0xc] sm:$0xf]
    %v2167 = vld [vmem:[#allocation7 + $0x10] sm:$0xf]
    %v2168 = vld [vmem:[#allocation7 + $0x14] sm:$0xf]
    %v2169 = vld [vmem:[#allocation7 + $0x18] sm:$0xf]
    %v2170 = vld [vmem:[#allocation7 + $0x1c] sm:$0xf]
    %v2171 = vld [vmem:[#allocation7 + $0x20] sm:$0xf]
    %v2172 = vld [vmem:[#allocation7 + $0x24] sm:$0xf]
    %v2173 = vld [vmem:[#allocation7 + $0x28] sm:$0xf]
    %v2174 = vld [vmem:[#allocation7 + $0x2c] sm:$0xf]
    %v2175 = vld [vmem:[#allocation7 + $0x30] sm:$0xf]
    %v2176 = vld [vmem:[#allocation7 + $0x34] sm:$0xf]
    %v2177 = vld [vmem:[#allocation7 + $0x38] sm:$0xf]
    %v2178 = vld [vmem:[#allocation7 + $0x3c] sm:$0xf]
    %v2179 = vlaneseq
    %v2180 = vshrl.u32 %v2179, 7
    %v2181 = vsub.s32 0, %v2180
    %v2182 = vrot.slane %v2161, %v2181
    %v2199 = vunpack.c.l.b16 %v2163
    %v2200 = vunpack.c.l.b16 %v2164
    %v2201 = vunpack.c.l.b16 %v2165
    %v2202 = vunpack.c.l.b16 %v2166
    %v2203 = vunpack.c.l.b16 %v2167
    %v2204 = vunpack.c.l.b16 %v2168
    %v2205 = vunpack.c.l.b16 %v2169
    %v2206 = vunpack.c.l.b16 %v2170
    %v2207 = vunpack.c.l.b16 %v2171
    %v2208 = vunpack.c.l.b16 %v2172
    %v2209 = vunpack.c.l.b16 %v2173
    %v2210 = vunpack.c.l.b16 %v2174
    %v2211 = vunpack.c.l.b16 %v2175
    %v2212 = vunpack.c.l.b16 %v2176
    %v2213 = vunpack.c.l.b16 %v2177
    %v2214 = vunpack.c.l.b16 %v2178
    %v2215 = vpack.c.b16 %v2200, %v2199
    %v2216 = vpack.c.b16 %v2202, %v2201
    %v2217 = vpack.c.b16 %v2204, %v2203
    %v2218 = vpack.c.b16 %v2206, %v2205
    %v2219 = vpack.c.b16 %v2208, %v2207
    %v2220 = vpack.c.b16 %v2210, %v2209
    %v2221 = vpack.c.b16 %v2212, %v2211
    %v2222 = vpack.c.b16 %v2214, %v2213
    %2231 = vmatprep.subr.bf16.mxu0 0
    %2232 = vmatpush1.bf16.msra.mxu0 %v2215
    %2233 = vmatprep.subr.bf16.mxu0 0
    %2234 = vmatpush1.bf16.msra.mxu0 %v2216
    %2235 = vmatprep.subr.bf16.mxu0 0
    %2236 = vmatpush1.bf16.msra.mxu0 %v2217
    %2237 = vmatprep.subr.bf16.mxu0 0
    %2238 = vmatpush1.bf16.msra.mxu0 %v2218
    %2239 = vmatprep.subr.bf16.mxu0 0
    %2240 = vmatpush1.bf16.msra.mxu0 %v2219
    %2241 = vmatprep.subr.bf16.mxu0 0
    %2242 = vmatpush1.bf16.msra.mxu0 %v2220
    %2243 = vmatprep.subr.bf16.mxu0 0
    %2244 = vmatpush1.bf16.msra.mxu0 %v2221
    %2245 = vmatprep.subr.bf16.mxu0 0
    %2246 = vmatpush1.bf16.msra.mxu0 %v2222
    %2247 = vmatprep.subr.bf16.mxu0 0
    %2248 = vmatpush1.bf16.msra.mxu0 0
    %2249 = vmatprep.subr.bf16.mxu0 0
    %2250 = vmatpush1.bf16.msra.mxu0 0
    %2251 = vmatprep.subr.bf16.mxu0 0
    %2252 = vmatpush1.bf16.msra.mxu0 0
    %2253 = vmatprep.subr.bf16.mxu0 0
    %2254 = vmatpush1.bf16.msra.mxu0 0
    %2255 = vmatprep.subr.bf16.mxu0 0
    %2256 = vmatpush1.bf16.msra.mxu0 0
    %2257 = vmatprep.subr.bf16.mxu0 0
    %2258 = vmatpush1.bf16.msra.mxu0 0
    %2259 = vmatprep.subr.bf16.mxu0 0
    %2260 = vmatpush1.bf16.msra.mxu0 0
    %2261 = vmatprep.subr.bf16.mxu0 0
    %2262 = vmatpush1.bf16.msra.mxu0 0
    %2263 = vmatprep.mubr.bf16.mxu0 0
    %2264 = vmatmul.mubr.bf16.gmra.mrb[0].mxu0 %v2162
    %v2265 = vpop.f32.mrb[0].mxu0
    %v2266 = vadd.f32 %v2182, %v2265
    %v2267 = vpop.f32.mrb[0].mxu0
    %v2268 = vpop.f32.mrb[0].mxu0
    %v2269 = vpop.f32.mrb[0].mxu0
    %2270 = vdwg.mxu0
    %v2271 = vrot.slane %v2266, 4
    %v2272 = vadd.f32 %v2266, %v2271
    %v2273 = vrot.slane %v2272, 2
    %v2274 = vadd.f32 %v2272, %v2273
    %v2275 = vrot.slane %v2274, 1
    %v2276 = vadd.f32 %v2274, %v2275
    %v2277 = vrcp.pop 8.0
    %v2278 = vmul.f32 %v2276, %v2277
    %v2279 = vsub.f32 %v2266, %v2278
    %v2280 = vmul.f32 %v2279, %v2279
    %v2281 = vrot.slane %v2280, 4
    %v2282 = vadd.f32 %v2280, %v2281
    %v2283 = vrot.slane %v2282, 2
    %v2284 = vadd.f32 %v2282, %v2283
    %v2285 = vrot.slane %v2284, 1
    %v2286 = vadd.f32 %v2284, %v2285
    %v2287 = vmul.f32 %v2286, %v2277
    %v2288 = vadd.f32 %v2287, 1e-05
    %v2289 = vrsqrt.pop %v2288
    %v2290 = vmul.f32 %v2279, %v2289
    %v2291 = vld [vmem:[%s5 + $0x2] sm:$0x1]
    %v2292 = vlaneseq
    %v2293 = vshrl.u32 %v2292, 7
    %v2294 = vsub.s32 0, %v2293
    %v2295 = vrot.slane %v2291, %v2294
    %v2296 = vmul.f32 %v2290, %v2295
    %v2297 = vld [vmem:[%s5 + $0x3] sm:$0x1]
    %v2298 = vlaneseq
    %v2299 = vshrl.u32 %v2298, 7
    %v2300 = vsub.s32 0, %v2299
    %v2301 = vrot.slane %v2297, %v2300
    %v2302 = vadd.f32 %v2296, %v2301
    %v2303 = vmax.f32 %v2302, 0.0
    %v2304 = vld [vmem:[%s5 + $0x4] sm:$0x1]
    %v2305 = vpack.c.bf16 %v2303, %v2303
    %v2306 = vld [vmem:[#allocation8] sm:$0xf]
    %v2307 = vld [vmem:[#allocation8 + $0x4] sm:$0xf]
    %v2308 = vld [vmem:[#allocation8 + $0x8] sm:$0xf]
    %v2309 = vld [vmem:[#allocation8 + $0xc] sm:$0xf]
    %v2310 = vld [vmem:[#allocation8 + $0x10] sm:$0xf]
    %v2311 = vld [vmem:[#allocation8 + $0x14] sm:$0xf]
    %v2312 = vld [vmem:[#allocation8 + $0x18] sm:$0xf]
    %v2313 = vld [vmem:[#allocation8 + $0x1c] sm:$0xf]
    %v2314 = vld [vmem:[#allocation8 + $0x20] sm:$0xf]
    %v2315 = vld [vmem:[#allocation8 + $0x24] sm:$0xf]
    %v2316 = vld [vmem:[#allocation8 + $0x28] sm:$0xf]
    %v2317 = vld [vmem:[#allocation8 + $0x2c] sm:$0xf]
    %v2318 = vld [vmem:[#allocation8 + $0x30] sm:$0xf]
    %v2319 = vld [vmem:[#allocation8 + $0x34] sm:$0xf]
    %v2320 = vld [vmem:[#allocation8 + $0x38] sm:$0xf]
    %v2321 = vld [vmem:[#allocation8 + $0x3c] sm:$0xf]
    %v2322 = vlaneseq
    %v2323 = vshrl.u32 %v2322, 7
    %v2324 = vsub.s32 0, %v2323
    %v2325 = vrot.slane %v2304, %v2324
    %v2342 = vunpack.c.l.b16 %v2306
    %v2343 = vunpack.c.l.b16 %v2307
    %v2344 = vunpack.c.l.b16 %v2308
    %v2345 = vunpack.c.l.b16 %v2309
    %v2346 = vunpack.c.l.b16 %v2310
    %v2347 = vunpack.c.l.b16 %v2311
    %v2348 = vunpack.c.l.b16 %v2312
    %v2349 = vunpack.c.l.b16 %v2313
    %v2350 = vunpack.c.l.b16 %v2314
    %v2351 = vunpack.c.l.b16 %v2315
    %v2352 = vunpack.c.l.b16 %v2316
    %v2353 = vunpack.c.l.b16 %v2317
    %v2354 = vunpack.c.l.b16 %v2318
    %v2355 = vunpack.c.l.b16 %v2319
    %v2356 = vunpack.c.l.b16 %v2320
    %v2357 = vunpack.c.l.b16 %v2321
    %v2358 = vpack.c.b16 %v2343, %v2342
    %v2359 = vpack.c.b16 %v2345, %v2344
    %v2360 = vpack.c.b16 %v2347, %v2346
    %v2361 = vpack.c.b16 %v2349, %v2348
    %v2362 = vpack.c.b16 %v2351, %v2350
    %v2363 = vpack.c.b16 %v2353, %v2352
    %v2364 = vpack.c.b16 %v2355, %v2354
    %v2365 = vpack.c.b16 %v2357, %v2356
    %2374 = vmatprep.subr.bf16.mxu0 0
    %2375 = vmatpush1.bf16.msra.mxu0 %v2358
    %2376 = vmatprep.subr.bf16.mxu0 0
    %2377 = vmatpush1.bf16.msra.mxu0 %v2359
    %2378 = vmatprep.subr.bf16.mxu0 0
    %2379 = vmatpush1.bf16.msra.mxu0 %v2360
    %2380 = vmatprep.subr.bf16.mxu0 0
    %2381 = vmatpush1.bf16.msra.mxu0 %v2361
    %2382 = vmatprep.subr.bf16.mxu0 0
    %2383 = vmatpush1.bf16.msra.mxu0 %v2362
    %2384 = vmatprep.subr.bf16.mxu0 0
    %2385 = vmatpush1.bf16.msra.mxu0 %v2363
    %2386 = vmatprep.subr.bf16.mxu0 0
    %2387 = vmatpush1.bf16.msra.mxu0 %v2364
    %2388 = vmatprep.subr.bf16.mxu0 0
    %2389 = vmatpush1.bf16.msra.mxu0 %v2365
    %2390 = vmatprep.subr.bf16.mxu0 0
    %2391 = vmatpush1.bf16.msra.mxu0 0
    %2392 = vmatprep.subr.bf16.mxu0 0
    %2393 = vmatpush1.bf16.msra.mxu0 0
    %2394 = vmatprep.subr.bf16.mxu0 0
    %2395 = vmatpush1.bf16.msra.mxu0 0
    %2396 = vmatprep.subr.bf16.mxu0 0
    %2397 = vmatpush1.bf16.msra.mxu0 0
    %2398 = vmatprep.subr.bf16.mxu0 0
    %2399 = vmatpush1.bf16.msra.mxu0 0
    %2400 = vmatprep.subr.bf16.mxu0 0
    %2401 = vmatpush1.bf16.msra.mxu0 0
    %2402 = vmatprep.subr.bf16.mxu0 0
    %2403 = vmatpush1.bf16.msra.mxu0 0
    %2404 = vmatprep.subr.bf16.mxu0 0
    %2405 = vmatpush1.bf16.msra.mxu0 0
    %2406 = vmatprep.mubr.bf16.mxu0 0
    %2407 = vmatmul.mubr.bf16.gmra.mrb[0].mxu0 %v2305
    %v2408 = vpop.f32.mrb[0].mxu0
    %v2409 = vadd.f32 %v2325, %v2408
    %v2410 = vpop.f32.mrb[0].mxu0
    %v2411 = vpop.f32.mrb[0].mxu0
    %v2412 = vpop.f32.mrb[0].mxu0
    %2413 = vdwg.mxu0
    %v2414 = vrot.slane %v2409, 4
    %v2415 = vadd.f32 %v2409, %v2414
    %v2416 = vrot.slane %v2415, 2
    %v2417 = vadd.f32 %v2415, %v2416
    %v2418 = vrot.slane %v2417, 1
    %v2419 = vadd.f32 %v2417, %v2418
    %v2420 = vmul.f32 %v2419, %v2277
    %v2421 = vsub.f32 %v2409, %v2420
    %v2422 = vmul.f32 %v2421, %v2421
    %v2423 = vrot.slane %v2422, 4
    %v2424 = vadd.f32 %v2422, %v2423
    %v2425 = vrot.slane %v2424, 2
    %v2426 = vadd.f32 %v2424, %v2425
    %v2427 = vrot.slane %v2426, 1
    %v2428 = vadd.f32 %v2426, %v2427
    %v2429 = vmul.f32 %v2428, %v2277
    %v2430 = vadd.f32 %v2429, 1e-05
    %v2431 = vrsqrt.pop %v2430
    %v2432 = vmul.f32 %v2421, %v2431
    %v2433 = vld [vmem:[%s5 + $0x5] sm:$0x1]
    %v2434 = vlaneseq
    %v2435 = vshrl.u32 %v2434, 7
    %v2436 = vsub.s32 0, %v2435
    %v2437 = vrot.slane %v2433, %v2436
    %v2438 = vmul.f32 %v2432, %v2437
    %v2439 = vld [vmem:[%s5 + $0x6] sm:$0x1]
    %v2440 = vlaneseq
    %v2441 = vshrl.u32 %v2440, 7
    %v2442 = vsub.s32 0, %v2441
    %v2443 = vrot.slane %v2439, %v2442
    %v2444 = vadd.f32 %v2438, %v2443
    %v2445 = vmax.f32 %v2444, 0.0
    %v2446 = vld [vmem:[%s5 + $0x7] sm:$0x1]
    %v2447 = vpack.c.bf16 %v2445, %v2445
    %v2448 = vld [vmem:[#allocation10] sm:$0xf]
    %v2449 = vld [vmem:[#allocation10 + $0x4] sm:$0xf]
    %v2450 = vld [vmem:[#allocation10 + $0x8] sm:$0xf]
    %v2451 = vld [vmem:[#allocation10 + $0xc] sm:$0xf]
    %v2452 = vld [vmem:[#allocation10 + $0x10] sm:$0xf]
    %v2453 = vld [vmem:[#allocation10 + $0x14] sm:$0xf]
    %v2454 = vld [vmem:[#allocation10 + $0x18] sm:$0xf]
    %v2455 = vld [vmem:[#allocation10 + $0x1c] sm:$0xf]
    %v2456 = vld [vmem:[#allocation10 + $0x20] sm:$0xf]
    %v2457 = vld [vmem:[#allocation10 + $0x24] sm:$0xf]
    %v2458 = vld [vmem:[#allocation10 + $0x28] sm:$0xf]
    %v2459 = vld [vmem:[#allocation10 + $0x2c] sm:$0xf]
    %v2460 = vld [vmem:[#allocation10 + $0x30] sm:$0xf]
    %v2461 = vld [vmem:[#allocation10 + $0x34] sm:$0xf]
    %v2462 = vld [vmem:[#allocation10 + $0x38] sm:$0xf]
    %v2463 = vld [vmem:[#allocation10 + $0x3c] sm:$0xf]
    %v2464 = vlaneseq
    %v2465 = vshrl.u32 %v2464, 7
    %v2466 = vsub.s32 0, %v2465
    %v2467 = vrot.slane %v2446, %v2466
    %v2484 = vunpack.c.l.b16 %v2448
    %v2485 = vunpack.c.l.b16 %v2449
    %v2486 = vunpack.c.l.b16 %v2450
    %v2487 = vunpack.c.l.b16 %v2451
    %v2488 = vunpack.c.l.b16 %v2452
    %v2489 = vunpack.c.l.b16 %v2453
    %v2490 = vunpack.c.l.b16 %v2454
    %v2491 = vunpack.c.l.b16 %v2455
    %v2492 = vunpack.c.l.b16 %v2456
    %v2493 = vunpack.c.l.b16 %v2457
    %v2494 = vunpack.c.l.b16 %v2458
    %v2495 = vunpack.c.l.b16 %v2459
    %v2496 = vunpack.c.l.b16 %v2460
    %v2497 = vunpack.c.l.b16 %v2461
    %v2498 = vunpack.c.l.b16 %v2462
    %v2499 = vunpack.c.l.b16 %v2463
    %v2500 = vpack.c.b16 %v2485, %v2484
    %v2501 = vpack.c.b16 %v2487, %v2486
    %v2502 = vpack.c.b16 %v2489, %v2488
    %v2503 = vpack.c.b16 %v2491, %v2490
    %v2504 = vpack.c.b16 %v2493, %v2492
    %v2505 = vpack.c.b16 %v2495, %v2494
    %v2506 = vpack.c.b16 %v2497, %v2496
    %v2507 = vpack.c.b16 %v2499, %v2498
    %2516 = vmatprep.subr.bf16.mxu0 0
    %2517 = vmatpush1.bf16.msra.mxu0 %v2500
    %2518 = vmatprep.subr.bf16.mxu0 0
    %2519 = vmatpush1.bf16.msra.mxu0 %v2501
    %2520 = vmatprep.subr.bf16.mxu0 0
    %2521 = vmatpush1.bf16.msra.mxu0 %v2502
    %2522 = vmatprep.subr.bf16.mxu0 0
    %2523 = vmatpush1.bf16.msra.mxu0 %v2503
    %2524 = vmatprep.subr.bf16.mxu0 0
    %2525 = vmatpush1.bf16.msra.mxu0 %v2504
    %2526 = vmatprep.subr.bf16.mxu0 0
    %2527 = vmatpush1.bf16.msra.mxu0 %v2505
    %2528 = vmatprep.subr.bf16.mxu0 0
    %2529 = vmatpush1.bf16.msra.mxu0 %v2506
    %2530 = vmatprep.subr.bf16.mxu0 0
    %2531 = vmatpush1.bf16.msra.mxu0 %v2507
    %2532 = vmatprep.subr.bf16.mxu0 0
    %2533 = vmatpush1.bf16.msra.mxu0 0
    %2534 = vmatprep.subr.bf16.mxu0 0
    %2535 = vmatpush1.bf16.msra.mxu0 0
    %2536 = vmatprep.subr.bf16.mxu0 0
    %2537 = vmatpush1.bf16.msra.mxu0 0
    %2538 = vmatprep.subr.bf16.mxu0 0
    %2539 = vmatpush1.bf16.msra.mxu0 0
    %2540 = vmatprep.subr.bf16.mxu0 0
    %2541 = vmatpush1.bf16.msra.mxu0 0
    %2542 = vmatprep.subr.bf16.mxu0 0
    %2543 = vmatpush1.bf16.msra.mxu0 0
    %2544 = vmatprep.subr.bf16.mxu0 0
    %2545 = vmatpush1.bf16.msra.mxu0 0
    %2546 = vmatprep.subr.bf16.mxu0 0
    %2547 = vmatpush1.bf16.msra.mxu0 0
    %2548 = vmatprep.mubr.bf16.mxu0 0
    %2549 = vmatmul.mubr.bf16.gmra.mrb[0].mxu0 %v2447
    %v2550 = vpop.f32.mrb[0].mxu0
    %v2551 = vadd.f32 %v2467, %v2550
    %v2552 = vpop.f32.mrb[0].mxu0
    %v2553 = vpop.f32.mrb[0].mxu0
    %v2554 = vpop.f32.mrb[0].mxu0
    %2555 = vdwg.mxu0
    %2556 = vst [vmem:[#allocation11] sm:$0xff] %v2551
    // Predicated region
    $region46: #{tpu_custom_call.1} parent=1 // pred_check
      _
    $region47: #{tpu_custom_call.1} parent=1 // pred_check_branch
      %2558 = sbr.rel (0) target = $region49
    $region48: #{tpu_custom_call.1} parent=1 // pred_region
      %s2560 = ssub.s32 128, 128
      %2561 = vsyncadd [#allocation4], %s2560
      %s2563 = sshll.u32 [#allocation11], 4
      %s2564 = int_to_ptr.vmem [resolvable:$true] %s2563
      %2566 = dma.vmem_to_hbm [thread:$0]  %s2564, 128, %s6, [#allocation4]
    $region49: #{tpu_custom_call.1} parent=1 // pred_fallthru
      _
    // Predicated region
    $region50: #{tpu_custom_call.1} parent=1 // pred_check
      _
    $region51: #{tpu_custom_call.1} parent=1 // pred_check_branch
      %2568 = sbr.rel (0) target = $region53
    $region52: #{tpu_custom_call.1} parent=1 // pred_region
      %2569 = dma.done [#allocation4], 128
    $region53: #{tpu_custom_call.1} parent=1 // pred_fallthru
      _
    %2570 = vsyncpa [#allocation3], 1
    %2571 = vsyncpa [#allocation6], 1
    %2572 = vsyncpa [#allocation9], 1
    %2573 = vsyncpa [#allocation4], 1

</llo_original>
